<compile_context>
chip_gen: v5e
topology: v5e:2x2
jax: 0.10.0
libtpu: 0.0.40
codegen_flags: <defaults>
</compile_context>

<pallas_src>
import jax
import jax.numpy as jnp
from jax.experimental import pallas as pl
from jax.experimental.pallas import tpu as pltpu

IN_FEATURES = 23                      # len(Board.state(slot)) with SIMPLE=False
DIMS = [IN_FEATURES, 512, 128, 32, 8, 2]
LN_EPS = 1e-5                         # nn.LayerNorm default

# --- packed small-parameter slab layout (f32, [184, 512]) -------------------
#   rows   0..11 : b1,g1,be1, b2,g2,be2, b3,g3,be3, b4,g4,be4  (lane-padded)
#   row       12 : b5
#   rows  13..15 : zero padding (keeps the weight blocks 8-row aligned)
#   rows  16..143: w3 [128, 32] in cols 0:32
#   rows 144..175: w4 [ 32,  8] in cols 0:8
#   rows 176..183: w5 [  8,  2] in cols 0:2
_VEC_ROWS = 16
_W3_ROW, _W4_ROW, _W5_ROW = 16, 144, 176
_SLAB_ROWS, _SLAB_COLS = 184, 512


def _layernorm_f32(h, gamma, beta, inv_n):
    # Two independent cross-lane reductions (XLU) -> the scheduler can overlap
    # them with the next layer's MXU push instead of serializing mu -> var.
    s1 = jnp.sum(h, axis=-1, keepdims=True)
    s2 = jnp.sum(h * h, axis=-1, keepdims=True)
    mu = s1 * inv_n
    var = jnp.maximum(s2 * inv_n - mu * mu, 0.0)
    return (h - mu) * jax.lax.rsqrt(var + LN_EPS) * gamma + beta


def dqn_kernel(x_ref, w1_ref, w2_ref, pslab_ref, o_ref):
    bf16 = jnp.bfloat16

    # ---- unpack the packed parameter slab (all f32) ----
    vs = pslab_ref[0:_VEC_ROWS, :]                        # [16, 512] f32
    b1, g1, be1 = vs[0:1, :],    vs[1:2, :],    vs[2:3, :]
    b2, g2, be2 = vs[3:4, :128], vs[4:5, :128], vs[5:6, :128]
    b3, g3, be3 = vs[6:7, :32],  vs[7:8, :32],  vs[8:9, :32]
    b4, g4, be4 = vs[9:10, :8],  vs[10:11, :8], vs[11:12, :8]
    b5 = vs[12:13, :2]
    w3 = pslab_ref[_W3_ROW:_W3_ROW + 128, 0:32].astype(bf16)
    w4 = pslab_ref[_W4_ROW:_W4_ROW + 32, 0:8].astype(bf16)
    w5 = pslab_ref[_W5_ROW:_W5_ROW + 8, 0:2].astype(bf16)

    # layer 1: Linear -> ReLU -> LayerNorm   (bf16 MXU operands, f32 accum/LN)
    h = jnp.dot(x_ref[...].astype(bf16), w1_ref[...],
                preferred_element_type=jnp.float32) + b1
    h = _layernorm_f32(jnp.maximum(h, 0.0), g1, be1, 1.0 / 512.0)
    # layer 2
    h = jnp.dot(h.astype(bf16), w2_ref[...],
                preferred_element_type=jnp.float32) + b2
    h = _layernorm_f32(jnp.maximum(h, 0.0), g2, be2, 1.0 / 128.0)
    # layer 3
    h = jnp.dot(h.astype(bf16), w3, preferred_element_type=jnp.float32) + b3
    h = _layernorm_f32(jnp.maximum(h, 0.0), g3, be3, 1.0 / 32.0)
    # layer 4
    h = jnp.dot(h.astype(bf16), w4, preferred_element_type=jnp.float32) + b4
    h = _layernorm_f32(jnp.maximum(h, 0.0), g4, be4, 1.0 / 8.0)
    # layer 5: plain Linear (no activation / norm)
    o_ref[...] = jnp.dot(h.astype(bf16), w5,
                         preferred_element_type=jnp.float32) + b5


def pack_params(params):
    """Pack params into the 4 kernel inputs: (w1 bf16, w2 bf16, pslab f32)."""
    f32, bf16 = jnp.float32, jnp.bfloat16
    slab = jnp.zeros((_SLAB_ROWS, _SLAB_COLS), f32)

    def put_row(s, row, vec):
        v = vec.reshape(-1).astype(f32)
        return s.at[row, :v.shape[0]].set(v)

    for li in range(1, 5):
        base = 3 * (li - 1)
        slab = put_row(slab, base + 0, params[f"b{li}"])
        slab = put_row(slab, base + 1, params[f"g{li}"])
        slab = put_row(slab, base + 2, params[f"beta{li}"])
    slab = put_row(slab, 12, params["b5"])
    slab = slab.at[_W3_ROW:_W3_ROW + 128, 0:32].set(params["w3"].astype(f32))
    slab = slab.at[_W4_ROW:_W4_ROW + 32, 0:8].set(params["w4"].astype(f32))
    slab = slab.at[_W5_ROW:_W5_ROW + 8, 0:2].set(params["w5"].astype(f32))
    return params["w1"].astype(bf16), params["w2"].astype(bf16), slab


def _default_batch_tile(B):
    # Largest tile that divides B, is a multiple of 8 and leaves grid >= 2
    # (grid >= 2 lets ("parallel",) shard across v7x's two TensorCores, and
    # lets BlockSpec double-buffering overlap the x / out DMAs with compute).
    for tb in (512, 256, 128, 64, 32, 16, 8):
        if B % tb == 0 and B // tb >= 2:
            return tb
    return B


def dqn_forward(x, params, *, batch_tile=None):
    """x: [B, 23] float32.  Returns [B, 2] float32 Q-values."""
    B, F = x.shape
    assert F == IN_FEATURES
    tb = _default_batch_tile(B) if batch_tile is None else batch_tile
    assert B % tb == 0 and (tb % 8 == 0 or tb == B)

    w1, w2, pslab = pack_params(params)

    return pl.pallas_call(
        dqn_kernel,
        out_shape=jax.ShapeDtypeStruct((B, DIMS[-1]), jnp.float32),
        grid_spec=pltpu.PrefetchScalarGridSpec(
            num_scalar_prefetch=0,
            grid=(B // tb,),
            in_specs=[
                pl.BlockSpec((tb, F), lambda i: (i, 0)),       # x, batch-tiled
                pl.BlockSpec(w1.shape, lambda i: (0, 0)),      # w1 (resident)
                pl.BlockSpec(w2.shape, lambda i: (0, 0)),      # w2 (resident)
                pl.BlockSpec(pslab.shape, lambda i: (0, 0)),   # packed params
            ],
            out_specs=pl.BlockSpec((tb, DIMS[-1]), lambda i: (i, 0)),
        ),
        compiler_params=pltpu.CompilerParams(
            dimension_semantics=("parallel",)),
    )(x, w1, w2, pslab)


def init_params(key):
    """nn.Linear default init (uniform +/- 1/sqrt(fan_in)); LayerNorm w=1, b=0.
    Linear weights stored as [in, out] (transpose of torch's [out, in])."""
    params = {}
    for li in range(1, 6):
        fan_in, fan_out = DIMS[li - 1], DIMS[li]
        key, kw, kb = jax.random.split(key, 3)
        bound = 1.0 / (fan_in ** 0.5)
        params[f"w{li}"] = jax.random.uniform(
            kw, (fan_in, fan_out), jnp.float32, -bound, bound)
        params[f"b{li}"] = jax.random.uniform(
            kb, (1, fan_out), jnp.float32, -bound, bound)
        if li <= 4:
            params[f"g{li}"] = jnp.ones((1, fan_out), jnp.float32)
            params[f"beta{li}"] = jnp.zeros((1, fan_out), jnp.float32)
    return params


def dqn_reference(x, params, *, mxu_bf16=True):
    """Pure-JAX reference (optionally matching the kernel's bf16 MXU operands)."""
    def mm(a, w):
        if mxu_bf16:
            a = a.astype(jnp.bfloat16)
            w = w.astype(jnp.bfloat16)
        return jnp.dot(a, w, preferred_element_type=jnp.float32)

    h = x
    for li in range(1, 5):
        h = jnp.maximum(mm(h, params[f"w{li}"]) + params[f"b{li}"], 0.0)
        mu = jnp.mean(h, axis=-1, keepdims=True)
        var = jnp.mean(jnp.square(h - mu), axis=-1, keepdims=True)
        h = ((h - mu) * jax.lax.rsqrt(var + LN_EPS)
             * params[f"g{li}"] + params[f"beta{li}"])
    return mm(h, params["w5"]) + params["b5"]


if __name__ == "__main__":
    key = jax.random.PRNGKey(0)
    key, kx = jax.random.split(key)
    B = 64                               # small, but enough for grid >= 2 (tile 32)
    x = jax.random.normal(kx, (B, IN_FEATURES), jnp.float32)
    params = init_params(key)

    out = jax.block_until_ready(dqn_forward(x, params))

    ref = dqn_reference(x, params, mxu_bf16=True)
    assert out.shape == (B, 2) and out.dtype == jnp.float32
    # bf16 MXU operands -> looser tolerance than the old pure-f32 check.
    assert jnp.allclose(out, ref, atol=2e-2, rtol=2e-2), \
        float(jnp.max(jnp.abs(out - ref)))

    print("KERNEL_OK")
</pallas_src>

<mosaic_0001>
module attributes {stable_mosaic.version = 11 : i64} {
  func.func @dqn_kernel(%arg0: i32, %arg1: memref<32x23xf32, #tpu.memory_space<vmem>>, %arg2: memref<23x512xbf16, #tpu.memory_space<vmem>>, %arg3: memref<512x128xbf16, #tpu.memory_space<vmem>>, %arg4: memref<184x512xf32, #tpu.memory_space<vmem>>, %arg5: memref<32x2xf32, #tpu.memory_space<vmem>>) attributes {dimension_semantics = [#tpu.dimension_semantics<parallel>], iteration_bounds = array<i64: 2>, scalar_prefetch = 0 : i64, scratch_operands = 0 : i64, tpu.core_type = #tpu.core_type<tc>, window_params = [{transform_indices = @transform_0, window_bounds = array<i64: 32, 23>}, {pipeline_mode = #tpu.pipeline_mode<synchronous>, transform_indices = @transform_1, window_bounds = array<i64: 23, 512>}, {pipeline_mode = #tpu.pipeline_mode<synchronous>, transform_indices = @transform_2, window_bounds = array<i64: 512, 128>}, {pipeline_mode = #tpu.pipeline_mode<synchronous>, transform_indices = @transform_3, window_bounds = array<i64: 184, 512>}, {transform_indices = @transform_4, window_bounds = array<i64: 32, 2>}]} {
    %c0 = arith.constant 0 : index
    %c0_0 = arith.constant 0 : index
    %0 = vector.load %arg4[%c0, %c0_0] : memref<184x512xf32, #tpu.memory_space<vmem>>, vector<16x512xf32>
    %1 = vector.extract_strided_slice %0 {offsets = [0, 0], sizes = [1, 512], strides = [1, 1]} : vector<16x512xf32> to vector<1x512xf32>
    %2 = vector.extract_strided_slice %0 {offsets = [1, 0], sizes = [1, 512], strides = [1, 1]} : vector<16x512xf32> to vector<1x512xf32>
    %3 = vector.extract_strided_slice %0 {offsets = [2, 0], sizes = [1, 512], strides = [1, 1]} : vector<16x512xf32> to vector<1x512xf32>
    %4 = vector.extract_strided_slice %0 {offsets = [3, 0], sizes = [1, 128], strides = [1, 1]} : vector<16x512xf32> to vector<1x128xf32>
    %5 = vector.extract_strided_slice %0 {offsets = [4, 0], sizes = [1, 128], strides = [1, 1]} : vector<16x512xf32> to vector<1x128xf32>
    %6 = vector.extract_strided_slice %0 {offsets = [5, 0], sizes = [1, 128], strides = [1, 1]} : vector<16x512xf32> to vector<1x128xf32>
    %7 = vector.extract_strided_slice %0 {offsets = [6, 0], sizes = [1, 32], strides = [1, 1]} : vector<16x512xf32> to vector<1x32xf32>
    %8 = vector.extract_strided_slice %0 {offsets = [7, 0], sizes = [1, 32], strides = [1, 1]} : vector<16x512xf32> to vector<1x32xf32>
    %9 = vector.extract_strided_slice %0 {offsets = [8, 0], sizes = [1, 32], strides = [1, 1]} : vector<16x512xf32> to vector<1x32xf32>
    %10 = vector.extract_strided_slice %0 {offsets = [9, 0], sizes = [1, 8], strides = [1, 1]} : vector<16x512xf32> to vector<1x8xf32>
    %11 = vector.extract_strided_slice %0 {offsets = [10, 0], sizes = [1, 8], strides = [1, 1]} : vector<16x512xf32> to vector<1x8xf32>
    %12 = vector.extract_strided_slice %0 {offsets = [11, 0], sizes = [1, 8], strides = [1, 1]} : vector<16x512xf32> to vector<1x8xf32>
    %13 = vector.extract_strided_slice %0 {offsets = [12, 0], sizes = [1, 2], strides = [1, 1]} : vector<16x512xf32> to vector<1x2xf32>
    %c16 = arith.constant 16 : index
    %c0_1 = arith.constant 0 : index
    %14 = vector.load %arg4[%c16, %c0_1] : memref<184x512xf32, #tpu.memory_space<vmem>>, vector<128x32xf32>
    %15 = arith.truncf %14 : vector<128x32xf32> to vector<128x32xbf16>
    %c144 = arith.constant 144 : index
    %c0_2 = arith.constant 0 : index
    %16 = vector.load %arg4[%c144, %c0_2] : memref<184x512xf32, #tpu.memory_space<vmem>>, vector<32x8xf32>
    %17 = arith.truncf %16 : vector<32x8xf32> to vector<32x8xbf16>
    %c176 = arith.constant 176 : index
    %c0_3 = arith.constant 0 : index
    %18 = vector.load %arg4[%c176, %c0_3] : memref<184x512xf32, #tpu.memory_space<vmem>>, vector<8x2xf32>
    %19 = arith.truncf %18 : vector<8x2xf32> to vector<8x2xbf16>
    %c0_4 = arith.constant 0 : index
    %c0_5 = arith.constant 0 : index
    %20 = vector.load %arg1[%c0_4, %c0_5] : memref<32x23xf32, #tpu.memory_space<vmem>>, vector<32x23xf32>
    %21 = arith.truncf %20 : vector<32x23xf32> to vector<32x23xbf16>
    %c0_6 = arith.constant 0 : index
    %c0_7 = arith.constant 0 : index
    %22 = vector.load %arg2[%c0_6, %c0_7] : memref<23x512xbf16, #tpu.memory_space<vmem>>, vector<23x512xbf16>
    %cst = arith.constant dense<0.000000e+00> : vector<32x512xf32>
    %23 = tpu.matmul %21, %22, %cst {dimension_numbers = #tpu.dot_dimension_numbers<[1], [0], [0], [1], [0, 0, 1, 1], [], []>} : vector<32x23xbf16>, vector<23x512xbf16>, vector<32x512xf32> -> vector<32x512xf32>
    %24 = vector.broadcast %1 : vector<1x512xf32> to vector<32x512xf32>
    %25 = arith.addf %23, %24 : vector<32x512xf32>
    %cst_8 = arith.constant 0.000000e+00 : f32
    %26 = vector.broadcast %cst_8 : f32 to vector<32x512xf32>
    %27 = arith.maximumf %25, %26 : vector<32x512xf32>
    %cst_9 = arith.constant dense<0.000000e+00> : vector<32xf32>
    %28 = vector.multi_reduction <add>, %27, %cst_9 [1] : vector<32x512xf32> to vector<32xf32>
    %29 = vector.shape_cast %28 : vector<32xf32> to vector<32x1xf32>
    %30 = arith.mulf %27, %27 : vector<32x512xf32>
    %cst_10 = arith.constant dense<0.000000e+00> : vector<32xf32>
    %31 = vector.multi_reduction <add>, %30, %cst_10 [1] : vector<32x512xf32> to vector<32xf32>
    %32 = vector.shape_cast %31 : vector<32xf32> to vector<32x1xf32>
    %cst_11 = arith.constant 0.001953125 : f32
    %33 = vector.broadcast %cst_11 : f32 to vector<32x1xf32>
    %34 = arith.mulf %29, %33 : vector<32x1xf32>
    %cst_12 = arith.constant 0.001953125 : f32
    %35 = vector.broadcast %cst_12 : f32 to vector<32x1xf32>
    %36 = arith.mulf %32, %35 : vector<32x1xf32>
    %37 = arith.mulf %34, %34 : vector<32x1xf32>
    %38 = arith.subf %36, %37 : vector<32x1xf32>
    %cst_13 = arith.constant 0.000000e+00 : f32
    %39 = vector.broadcast %cst_13 : f32 to vector<32x1xf32>
    %40 = arith.maximumf %38, %39 : vector<32x1xf32>
    %41 = vector.broadcast %34 : vector<32x1xf32> to vector<32x512xf32>
    %42 = arith.subf %27, %41 : vector<32x512xf32>
    %cst_14 = arith.constant 9.99999974E-6 : f32
    %43 = vector.broadcast %cst_14 : f32 to vector<32x1xf32>
    %44 = arith.addf %40, %43 : vector<32x1xf32>
    %45 = math.rsqrt %44 : vector<32x1xf32>
    %46 = vector.broadcast %45 : vector<32x1xf32> to vector<32x512xf32>
    %47 = arith.mulf %42, %46 : vector<32x512xf32>
    %48 = vector.broadcast %2 : vector<1x512xf32> to vector<32x512xf32>
    %49 = arith.mulf %47, %48 : vector<32x512xf32>
    %50 = vector.broadcast %3 : vector<1x512xf32> to vector<32x512xf32>
    %51 = arith.addf %49, %50 : vector<32x512xf32>
    %52 = arith.truncf %51 : vector<32x512xf32> to vector<32x512xbf16>
    %c0_15 = arith.constant 0 : index
    %c0_16 = arith.constant 0 : index
    %53 = vector.load %arg3[%c0_15, %c0_16] : memref<512x128xbf16, #tpu.memory_space<vmem>>, vector<512x128xbf16>
    %cst_17 = arith.constant dense<0.000000e+00> : vector<32x128xf32>
    %54 = tpu.matmul %52, %53, %cst_17 {dimension_numbers = #tpu.dot_dimension_numbers<[1], [0], [0], [1], [0, 0, 1, 1], [], []>} : vector<32x512xbf16>, vector<512x128xbf16>, vector<32x128xf32> -> vector<32x128xf32>
    %55 = vector.broadcast %4 : vector<1x128xf32> to vector<32x128xf32>
    %56 = arith.addf %54, %55 : vector<32x128xf32>
    %cst_18 = arith.constant 0.000000e+00 : f32
    %57 = vector.broadcast %cst_18 : f32 to vector<32x128xf32>
    %58 = arith.maximumf %56, %57 : vector<32x128xf32>
    %cst_19 = arith.constant dense<0.000000e+00> : vector<32xf32>
    %59 = vector.multi_reduction <add>, %58, %cst_19 [1] : vector<32x128xf32> to vector<32xf32>
    %60 = vector.shape_cast %59 : vector<32xf32> to vector<32x1xf32>
    %61 = arith.mulf %58, %58 : vector<32x128xf32>
    %cst_20 = arith.constant dense<0.000000e+00> : vector<32xf32>
    %62 = vector.multi_reduction <add>, %61, %cst_20 [1] : vector<32x128xf32> to vector<32xf32>
    %63 = vector.shape_cast %62 : vector<32xf32> to vector<32x1xf32>
    %cst_21 = arith.constant 7.812500e-03 : f32
    %64 = vector.broadcast %cst_21 : f32 to vector<32x1xf32>
    %65 = arith.mulf %60, %64 : vector<32x1xf32>
    %cst_22 = arith.constant 7.812500e-03 : f32
    %66 = vector.broadcast %cst_22 : f32 to vector<32x1xf32>
    %67 = arith.mulf %63, %66 : vector<32x1xf32>
    %68 = arith.mulf %65, %65 : vector<32x1xf32>
    %69 = arith.subf %67, %68 : vector<32x1xf32>
    %cst_23 = arith.constant 0.000000e+00 : f32
    %70 = vector.broadcast %cst_23 : f32 to vector<32x1xf32>
    %71 = arith.maximumf %69, %70 : vector<32x1xf32>
    %72 = vector.broadcast %65 : vector<32x1xf32> to vector<32x128xf32>
    %73 = arith.subf %58, %72 : vector<32x128xf32>
    %cst_24 = arith.constant 9.99999974E-6 : f32
    %74 = vector.broadcast %cst_24 : f32 to vector<32x1xf32>
    %75 = arith.addf %71, %74 : vector<32x1xf32>
    %76 = math.rsqrt %75 : vector<32x1xf32>
    %77 = vector.broadcast %76 : vector<32x1xf32> to vector<32x128xf32>
    %78 = arith.mulf %73, %77 : vector<32x128xf32>
    %79 = vector.broadcast %5 : vector<1x128xf32> to vector<32x128xf32>
    %80 = arith.mulf %78, %79 : vector<32x128xf32>
    %81 = vector.broadcast %6 : vector<1x128xf32> to vector<32x128xf32>
    %82 = arith.addf %80, %81 : vector<32x128xf32>
    %83 = arith.truncf %82 : vector<32x128xf32> to vector<32x128xbf16>
    %cst_25 = arith.constant dense<0.000000e+00> : vector<32x32xf32>
    %84 = tpu.matmul %83, %15, %cst_25 {dimension_numbers = #tpu.dot_dimension_numbers<[1], [0], [0], [1], [0, 0, 1, 1], [], []>} : vector<32x128xbf16>, vector<128x32xbf16>, vector<32x32xf32> -> vector<32x32xf32>
    %85 = vector.broadcast %7 : vector<1x32xf32> to vector<32x32xf32>
    %86 = arith.addf %84, %85 : vector<32x32xf32>
    %cst_26 = arith.constant 0.000000e+00 : f32
    %87 = vector.broadcast %cst_26 : f32 to vector<32x32xf32>
    %88 = arith.maximumf %86, %87 : vector<32x32xf32>
    %cst_27 = arith.constant dense<0.000000e+00> : vector<32xf32>
    %89 = vector.multi_reduction <add>, %88, %cst_27 [1] : vector<32x32xf32> to vector<32xf32>
    %90 = vector.shape_cast %89 : vector<32xf32> to vector<32x1xf32>
    %91 = arith.mulf %88, %88 : vector<32x32xf32>
    %cst_28 = arith.constant dense<0.000000e+00> : vector<32xf32>
    %92 = vector.multi_reduction <add>, %91, %cst_28 [1] : vector<32x32xf32> to vector<32xf32>
    %93 = vector.shape_cast %92 : vector<32xf32> to vector<32x1xf32>
    %cst_29 = arith.constant 3.125000e-02 : f32
    %94 = vector.broadcast %cst_29 : f32 to vector<32x1xf32>
    %95 = arith.mulf %90, %94 : vector<32x1xf32>
    %cst_30 = arith.constant 3.125000e-02 : f32
    %96 = vector.broadcast %cst_30 : f32 to vector<32x1xf32>
    %97 = arith.mulf %93, %96 : vector<32x1xf32>
    %98 = arith.mulf %95, %95 : vector<32x1xf32>
    %99 = arith.subf %97, %98 : vector<32x1xf32>
    %cst_31 = arith.constant 0.000000e+00 : f32
    %100 = vector.broadcast %cst_31 : f32 to vector<32x1xf32>
    %101 = arith.maximumf %99, %100 : vector<32x1xf32>
    %102 = vector.broadcast %95 : vector<32x1xf32> to vector<32x32xf32>
    %103 = arith.subf %88, %102 : vector<32x32xf32>
    %cst_32 = arith.constant 9.99999974E-6 : f32
    %104 = vector.broadcast %cst_32 : f32 to vector<32x1xf32>
    %105 = arith.addf %101, %104 : vector<32x1xf32>
    %106 = math.rsqrt %105 : vector<32x1xf32>
    %107 = vector.broadcast %106 : vector<32x1xf32> to vector<32x32xf32>
    %108 = arith.mulf %103, %107 : vector<32x32xf32>
    %109 = vector.broadcast %8 : vector<1x32xf32> to vector<32x32xf32>
    %110 = arith.mulf %108, %109 : vector<32x32xf32>
    %111 = vector.broadcast %9 : vector<1x32xf32> to vector<32x32xf32>
    %112 = arith.addf %110, %111 : vector<32x32xf32>
    %113 = arith.truncf %112 : vector<32x32xf32> to vector<32x32xbf16>
    %cst_33 = arith.constant dense<0.000000e+00> : vector<32x8xf32>
    %114 = tpu.matmul %113, %17, %cst_33 {dimension_numbers = #tpu.dot_dimension_numbers<[1], [0], [0], [1], [0, 0, 1, 1], [], []>} : vector<32x32xbf16>, vector<32x8xbf16>, vector<32x8xf32> -> vector<32x8xf32>
    %115 = vector.broadcast %10 : vector<1x8xf32> to vector<32x8xf32>
    %116 = arith.addf %114, %115 : vector<32x8xf32>
    %cst_34 = arith.constant 0.000000e+00 : f32
    %117 = vector.broadcast %cst_34 : f32 to vector<32x8xf32>
    %118 = arith.maximumf %116, %117 : vector<32x8xf32>
    %cst_35 = arith.constant dense<0.000000e+00> : vector<32xf32>
    %119 = vector.multi_reduction <add>, %118, %cst_35 [1] : vector<32x8xf32> to vector<32xf32>
    %120 = vector.shape_cast %119 : vector<32xf32> to vector<32x1xf32>
    %121 = arith.mulf %118, %118 : vector<32x8xf32>
    %cst_36 = arith.constant dense<0.000000e+00> : vector<32xf32>
    %122 = vector.multi_reduction <add>, %121, %cst_36 [1] : vector<32x8xf32> to vector<32xf32>
    %123 = vector.shape_cast %122 : vector<32xf32> to vector<32x1xf32>
    %cst_37 = arith.constant 1.250000e-01 : f32
    %124 = vector.broadcast %cst_37 : f32 to vector<32x1xf32>
    %125 = arith.mulf %120, %124 : vector<32x1xf32>
    %cst_38 = arith.constant 1.250000e-01 : f32
    %126 = vector.broadcast %cst_38 : f32 to vector<32x1xf32>
    %127 = arith.mulf %123, %126 : vector<32x1xf32>
    %128 = arith.mulf %125, %125 : vector<32x1xf32>
    %129 = arith.subf %127, %128 : vector<32x1xf32>
    %cst_39 = arith.constant 0.000000e+00 : f32
    %130 = vector.broadcast %cst_39 : f32 to vector<32x1xf32>
    %131 = arith.maximumf %129, %130 : vector<32x1xf32>
    %132 = vector.broadcast %125 : vector<32x1xf32> to vector<32x8xf32>
    %133 = arith.subf %118, %132 : vector<32x8xf32>
    %cst_40 = arith.constant 9.99999974E-6 : f32
    %134 = vector.broadcast %cst_40 : f32 to vector<32x1xf32>
    %135 = arith.addf %131, %134 : vector<32x1xf32>
    %136 = math.rsqrt %135 : vector<32x1xf32>
    %137 = vector.broadcast %136 : vector<32x1xf32> to vector<32x8xf32>
    %138 = arith.mulf %133, %137 : vector<32x8xf32>
    %139 = vector.broadcast %11 : vector<1x8xf32> to vector<32x8xf32>
    %140 = arith.mulf %138, %139 : vector<32x8xf32>
    %141 = vector.broadcast %12 : vector<1x8xf32> to vector<32x8xf32>
    %142 = arith.addf %140, %141 : vector<32x8xf32>
    %143 = arith.truncf %142 : vector<32x8xf32> to vector<32x8xbf16>
    %cst_41 = arith.constant dense<0.000000e+00> : vector<32x2xf32>
    %144 = tpu.matmul %143, %19, %cst_41 {dimension_numbers = #tpu.dot_dimension_numbers<[1], [0], [0], [1], [0, 0, 1, 1], [], []>} : vector<32x8xbf16>, vector<8x2xbf16>, vector<32x2xf32> -> vector<32x2xf32>
    %145 = vector.broadcast %13 : vector<1x2xf32> to vector<32x2xf32>
    %146 = arith.addf %144, %145 : vector<32x2xf32>
    %c0_42 = arith.constant 0 : index
    %c0_43 = arith.constant 0 : index
    %147 = vector.load %arg5[%c0_42, %c0_43] : memref<32x2xf32, #tpu.memory_space<vmem>>, vector<32x2xf32>
    tpu.vector_store %arg5[%c0_42, %c0_43], %146 {strides = array<i32>} : memref<32x2xf32, #tpu.memory_space<vmem>>, vector<32x2xf32>,
    return
  }
  func.func @transform_0(%arg0: i32) -> (i32, i32) {
    %c0_i32 = arith.constant 0 : i32
    %c0_i32_0 = arith.constant 0 : i32
    return %arg0, %c0_i32 : i32, i32
  }
  func.func @transform_1(%arg0: i32) -> (i32, i32) {
    %c0_i32 = arith.constant 0 : i32
    %c0_i32_0 = arith.constant 0 : i32
    %c0_i32_1 = arith.constant 0 : i32
    return %c0_i32, %c0_i32_0 : i32, i32
  }
  func.func @transform_2(%arg0: i32) -> (i32, i32) {
    %c0_i32 = arith.constant 0 : i32
    %c0_i32_0 = arith.constant 0 : i32
    %c0_i32_1 = arith.constant 0 : i32
    return %c0_i32, %c0_i32_0 : i32, i32
  }
  func.func @transform_3(%arg0: i32) -> (i32, i32) {
    %c0_i32 = arith.constant 0 : i32
    %c0_i32_0 = arith.constant 0 : i32
    %c0_i32_1 = arith.constant 0 : i32
    return %c0_i32, %c0_i32_0 : i32, i32
  }
  func.func @transform_4(%arg0: i32) -> (i32, i32) {
    %c0_i32 = arith.constant 0 : i32
    %c0_i32_0 = arith.constant 0 : i32
    return %arg0, %c0_i32 : i32, i32
  }
}

</mosaic_0001>

<llo_original>
// kernel: tpu_custom_call.1
$region0: #{tpu_custom_call.1}
  #allocation0 [shape = 'u32[]', space=smem, size = 0x4, offset = 0x4, fixed_abs, tag = 'smem constant byte address 0x4 - core index']
  #allocation1 [shape = 'u32[72,128]{1,0:T(1,128)}', space=vmem, size = 0x9000, scoped, tag = 'internal scratch']
  %s0 = inlined_call_operand.vmem [shape: f32[64,23], index: 0, kind: input, shape index: {}]
  %s1 = inlined_call_operand.vmem [shape: bf16[23,512], index: 1, kind: input, shape index: {}]
  %s2 = inlined_call_operand.hbm [shape: bf16[512,128], index: 2, kind: input, shape index: {}]
  %s3 = inlined_call_operand.hbm [shape: f32[184,512], index: 3, kind: input, shape index: {}]
  %s4 = inlined_call_operand.vmem [shape: f32[64,2], index: 4, kind: output, shape index: {}]
  %s5 = sld [smem:[#allocation0]]
  $region57: #{tpu_custom_call.1} parent=0
    _
  %s7 = ssub.s32 1, %s5
  %s8 = scalar_select 0, %s7, %s5
  $region1: #{tpu_custom_call.1} parent=0
    #allocation2 [shape = 'u8[131072]{0}', space=vmem, size = 0x20000, scoped, tag = 'input window, operand 2, single buffered']
    #allocation3 [shape = 's32[2]{0}', space=sflag, size = 0x8, scoped, tag = 'scoped memory for tpu_custom_call.1']
    #allocation4 [shape = 'u8[376832]{0}', space=vmem, size = 0x5c000, scoped, tag = 'input window, operand 3, single buffered']
    #allocation5 [shape = 's32[1]{0}', space=sflag, size = 0x4, scoped, tag = 'scoped memory for tpu_custom_call.1']
    %9 = vsyncpa [#allocation3], 0
    %10 = vsyncpa [#allocation5], 0
    loop: start=0, step=1, limit=4
    $region2: #{tpu_custom_call.1} parent=1 // loop_pre_header
      _
    $region3: #{tpu_custom_call.1} parent=1 // loop_header
      %s12 = sphi 0, %s16
      %p13 = scmp.ge.s32.totalorder %s12, 4
      %s22 = sphi 0, %s24
      %s25 = sphi 0, %s22
      %s26 = sphi 0, %s25
      %s42 = sphi 0, %s26
      %s46 = sphi 0, %s46
      %s48 = sphi 0, %s46
      %s49 = sphi 0, %s48
      %s63 = sphi 0, %s49
      %s67 = sphi 0, %s67
      %s69 = sphi 0, %s67
      %s70 = sphi 0, %s69
      %s84 = sphi 0, %s70
      %s88 = sphi 0, %s88
      %s90 = sphi 0, %s88
      %s91 = sphi 0, %s90
      %s105 = sphi 0, %s91
      %s111 = sphi 0, %s113
      %s114 = sphi 0, %s111
      %s115 = sphi 0, %s114
      %s131 = sphi 0, %s115
    $region4: #{tpu_custom_call.1} parent=1 // loop_header_branch
      %15 = sbr.rel (%p13) target = $region8
    $region5: #{tpu_custom_call.1} parent=1 // loop_body
      %s17 = ssub.s32 %s12, 1
      %s18 = ssub.s32 %s12, 2
      %s19 = sadd.s32 %s12, 1
      %s20 = ssub.s32 %s12, %s19
      %p21 = scmp.eq.s32.totalorder %s20, 0
      %s23 = sadd.s32 %s22, 1
      %s24 = scalar_select %p21, %s22, %s23
      %p27 = pneg %p21
      %p28 = scmp.eq.s32.totalorder %s12, 1
      %p29 = por %p27, %p28
      %p30 = scmp.ne.s32.totalorder %s22, %s25
      %p31 = scmp.eq.s32.totalorder %s12, 0
      %p32 = por %p30, %p31
      %p33 = scmp.ne.s32.totalorder %s22, %s25
      %p34 = scmp.eq.s32.totalorder %s17, 1
      %p35 = por %p33, %p34
      %p36 = scmp.ne.s32.totalorder %s25, %s26
      %p37 = scmp.eq.s32.totalorder %s17, 0
      %p38 = por %p36, %p37
      %p39 = scmp.ne.s32.totalorder %s25, %s26
      %p40 = scmp.eq.s32.totalorder %s18, 1
      %p41 = por %p39, %p40
      %p43 = scmp.ne.s32.totalorder %s26, %s42
      %p44 = scmp.eq.s32.totalorder %s18, 0
      %p45 = por %p43, %p44
      %s47 = sadd.s32 %s46, 1
      %p50 = scmp.eq.s32.totalorder %s12, 1
      %p51 = scmp.ne.s32.totalorder %s46, %s48
      %p52 = scmp.eq.s32.totalorder %s12, 0
      %p53 = por %p51, %p52
      %p54 = scmp.ne.s32.totalorder %s46, %s48
      %p55 = scmp.eq.s32.totalorder %s17, 1
      %p56 = por %p54, %p55
      %p57 = scmp.ne.s32.totalorder %s48, %s49
      %p58 = scmp.eq.s32.totalorder %s17, 0
      %p59 = por %p57, %p58
      %p60 = scmp.ne.s32.totalorder %s48, %s49
      %p61 = scmp.eq.s32.totalorder %s18, 1
      %p62 = por %p60, %p61
      %p64 = scmp.ne.s32.totalorder %s49, %s63
      %p65 = scmp.eq.s32.totalorder %s18, 0
      %p66 = por %p64, %p65
      %s68 = sadd.s32 %s67, 1
      %p71 = scmp.eq.s32.totalorder %s12, 1
      %p72 = scmp.ne.s32.totalorder %s67, %s69
      %p73 = scmp.eq.s32.totalorder %s12, 0
      %p74 = por %p72, %p73
      %p75 = scmp.ne.s32.totalorder %s67, %s69
      %p76 = scmp.eq.s32.totalorder %s17, 1
      %p77 = por %p75, %p76
      %p78 = scmp.ne.s32.totalorder %s69, %s70
      %p79 = scmp.eq.s32.totalorder %s17, 0
      %p80 = por %p78, %p79
      %p81 = scmp.ne.s32.totalorder %s69, %s70
      %p82 = scmp.eq.s32.totalorder %s18, 1
      %p83 = por %p81, %p82
      %p85 = scmp.ne.s32.totalorder %s70, %s84
      %p86 = scmp.eq.s32.totalorder %s18, 0
      %p87 = por %p85, %p86
      %s89 = sadd.s32 %s88, 1
      %p92 = scmp.eq.s32.totalorder %s12, 1
      %p93 = scmp.ne.s32.totalorder %s88, %s90
      %p94 = scmp.eq.s32.totalorder %s12, 0
      %p95 = por %p93, %p94
      %p96 = scmp.ne.s32.totalorder %s88, %s90
      %p97 = scmp.eq.s32.totalorder %s17, 1
      %p98 = por %p96, %p97
      %p99 = scmp.ne.s32.totalorder %s90, %s91
      %p100 = scmp.eq.s32.totalorder %s17, 0
      %p101 = por %p99, %p100
      %p102 = scmp.ne.s32.totalorder %s90, %s91
      %p103 = scmp.eq.s32.totalorder %s18, 1
      %p104 = por %p102, %p103
      %p106 = scmp.ne.s32.totalorder %s91, %s105
      %p107 = scmp.eq.s32.totalorder %s18, 0
      %p108 = por %p106, %p107
      %s109 = ssub.s32 %s12, %s19
      %p110 = scmp.eq.s32.totalorder %s109, 0
      %s112 = sadd.s32 %s111, 1
      %s113 = scalar_select %p110, %s111, %s112
      %p116 = pneg %p110
      %p117 = scmp.eq.s32.totalorder %s12, 1
      %p118 = por %p116, %p117
      %p119 = scmp.ne.s32.totalorder %s111, %s114
      %p120 = scmp.eq.s32.totalorder %s12, 0
      %p121 = por %p119, %p120
      %p122 = scmp.ne.s32.totalorder %s111, %s114
      %p123 = scmp.eq.s32.totalorder %s17, 1
      %p124 = por %p122, %p123
      %p125 = scmp.ne.s32.totalorder %s114, %s115
      %p126 = scmp.eq.s32.totalorder %s17, 0
      %p127 = por %p125, %p126
      %p128 = scmp.ne.s32.totalorder %s114, %s115
      %p129 = scmp.eq.s32.totalorder %s18, 1
      %p130 = por %p128, %p129
      %p132 = scmp.ne.s32.totalorder %s115, %s131
      %p133 = scmp.eq.s32.totalorder %s18, 0
      %p134 = por %p132, %p133
      %p135 = scmp.le.s32.totalorder 1, %s12
      %p136 = scmp.lt.s32.totalorder %s12, 3
      %p137 = pnand %p135, %p136
      %p138 = pneg %p137
      // Predicated region
      $region9: #{tpu_custom_call.1} parent=5 // pred_check
        _
      $region10: #{tpu_custom_call.1} parent=5 // pred_check_branch
        %140 = sbr.rel (%p137) target = $region12
      $region11: #{tpu_custom_call.1} parent=5 // pred_region
        %s141 = ssub.s32 %s12, 1
        // Predicated region
        $region13: #{tpu_custom_call.1} parent=11 // pred_check
          %p142 = pneg %p59
        $region14: #{tpu_custom_call.1} parent=11 // pred_check_branch
          %144 = sbr.rel (%p142) target = $region16
        $region15: #{tpu_custom_call.1} parent=11 // pred_region
          _
        $region16: #{tpu_custom_call.1} parent=11 // pred_fallthru
          _
        // Predicated region
        $region17: #{tpu_custom_call.1} parent=11 // pred_check
          %p145 = pneg %p80
        $region18: #{tpu_custom_call.1} parent=11 // pred_check_branch
          %147 = sbr.rel (%p145) target = $region20
        $region19: #{tpu_custom_call.1} parent=11 // pred_region
          %149 = vsyncadd [#allocation3], 0
          %s150 = sshll.u32 %s2, 4
          %s151 = int_to_ptr.hbm [resolvable:$true] %s150
          %s152 = sshll.u32 [#allocation2], 4
          %s153 = int_to_ptr.vmem [resolvable:$true] %s152
          %158 = dma.hbm_to_vmem [thread:$0]  %s151, 4096, %s153, [#allocation3], 64, 64, 4
        $region20: #{tpu_custom_call.1} parent=11 // pred_fallthru
          _
        // Predicated region
        $region21: #{tpu_custom_call.1} parent=11 // pred_check
          %p159 = pneg %p101
        $region22: #{tpu_custom_call.1} parent=11 // pred_check_branch
          %161 = sbr.rel (%p159) target = $region24
        $region23: #{tpu_custom_call.1} parent=11 // pred_region
          %163 = vsyncadd [#allocation5], 0
          %s164 = sshll.u32 %s3, 4
          %s165 = int_to_ptr.hbm [resolvable:$true] %s164
          %s166 = sshll.u32 [#allocation4], 4
          %s167 = int_to_ptr.vmem [resolvable:$true] %s166
          %172 = dma.hbm_to_vmem [thread:$0]  %s165, 11776, %s167, [#allocation5], 512, 512, 32
        $region24: #{tpu_custom_call.1} parent=11 // pred_fallthru
          _
      $region12: #{tpu_custom_call.1} parent=5 // pred_fallthru
        _
      %p173 = scmp.lt.s32.totalorder %s12, 2
      // Predicated region
      $region25: #{tpu_custom_call.1} parent=5 // pred_check
        %p174 = pneg %p173
      $region26: #{tpu_custom_call.1} parent=5 // pred_check_branch
        %176 = sbr.rel (%p174) target = $region28
      $region27: #{tpu_custom_call.1} parent=5 // pred_region
        // Predicated region
        $region29: #{tpu_custom_call.1} parent=27 // pred_check
          %p177 = pneg %p32
        $region30: #{tpu_custom_call.1} parent=27 // pred_check_branch
          %179 = sbr.rel (%p177) target = $region32
        $region31: #{tpu_custom_call.1} parent=27 // pred_region
          %s180 = smul.u32 4, %s12
          %p181 = scmp.lt.s32.totalorder %s180, 7
          %s182 = scalar_select %p181, %s180, 7
          %s183 = smul.addr %s182, 8
          %s184 = scalar_lea.vmem %s0, %s183
          %s185 = smul.u32 4, %s12
        $region32: #{tpu_custom_call.1} parent=27 // pred_fallthru
          _
      $region28: #{tpu_custom_call.1} parent=5 // pred_fallthru
        _
      %p186 = scmp.le.s32.totalorder 1, %s12
      %p187 = scmp.lt.s32.totalorder %s12, 3
      %p188 = pnand %p186, %p187
      %p189 = pneg %p188
      // Predicated region
      $region33: #{tpu_custom_call.1} parent=5 // pred_check
        _
      $region34: #{tpu_custom_call.1} parent=5 // pred_check_branch
        %191 = sbr.rel (%p188) target = $region36
      $region35: #{tpu_custom_call.1} parent=5 // pred_region
        %s192 = ssub.s32 %s12, 1
        // Predicated region
        $region37: #{tpu_custom_call.1} parent=35 // pred_check
          %p193 = pneg %p80
        $region38: #{tpu_custom_call.1} parent=35 // pred_check_branch
          %195 = sbr.rel (%p193) target = $region40
        $region39: #{tpu_custom_call.1} parent=35 // pred_region
          %197 = dma.done [#allocation3], 4096
        $region40: #{tpu_custom_call.1} parent=35 // pred_fallthru
          _
        // Predicated region
        $region41: #{tpu_custom_call.1} parent=35 // pred_check
          %p198 = pneg %p101
        $region42: #{tpu_custom_call.1} parent=35 // pred_check_branch
          %200 = sbr.rel (%p198) target = $region44
        $region43: #{tpu_custom_call.1} parent=35 // pred_region
          %202 = dma.done [#allocation5], 11776
        $region44: #{tpu_custom_call.1} parent=35 // pred_fallthru
          _
        %s203 = smul.u32 4, %s17
        %p204 = scmp.lt.s32.totalorder %s203, 7
        %s205 = scalar_select %p204, %s203, 7
        %s206 = smul.addr %s205, 8
        %s207 = scalar_lea.vmem %s0, %s206
        %p208 = pneg %p38
        %p209 = pneg %p35
        %p210 = pneg %p59
        %p211 = pneg %p56
        %p212 = pneg %p80
        %p213 = pneg %p77
        %p214 = pneg %p101
        %p215 = pneg %p98
        %p216 = pneg %p127
        %p217 = pneg %p124
        %s218 = smul.u32 4, %s17
        %p219 = scmp.lt.s32.totalorder %s218, 7
        %s220 = scalar_select %p219, %s218, 7
        %s221 = smul.addr %s220, 8
        %s222 = scalar_lea.vmem %s4, %s221
        %s223 = smul.u32 4, %s17
        %p224 = scmp.lt.s32.totalorder %s223, 7
        %s225 = scalar_select %p224, %s223, 7
        %s226 = smul.addr %s225, 8
        %s227 = scalar_lea.vmem %s0, %s226
        %s228 = smul.u32 4, %s17
        %s229 = smul.u32 4, %s17
        %p230 = scmp.lt.s32.totalorder %s229, 7
        %s231 = scalar_select %p230, %s229, 7
        %s232 = smul.addr %s231, 8
        %s233 = scalar_lea.vmem %s4, %s232
        %s234 = smul.u32 4, %s17
        %v236 = vld [vmem:[#allocation4] sm:$0xff]
        %v237 = vld [vmem:[#allocation4 + $0x8] sm:$0xff]
        %v238 = vld [vmem:[#allocation4 + $0x10] sm:$0xff]
        %v239 = vld [vmem:[#allocation4 + $0x18] sm:$0xff]
        %v240 = vld [vmem:[#allocation4 + $0x20] sm:$0xff]
        %v241 = vld [vmem:[#allocation4 + $0x40] sm:$0xff]
        %v242 = vld [vmem:[#allocation4 + $0x60] sm:$0xff]
        %v243 = vld [vmem:[#allocation4 + $0x80] sm:$0xff]
        %v244 = vld [vmem:[#allocation4 + $0xa0] sm:$0xff]
        %v245 = vld [vmem:[#allocation4 + $0xc0] sm:$0xff]
        %v246 = vld [vmem:[#allocation4 + $0xe0] sm:$0xff]
        %v247 = vld [vmem:[#allocation4 + $0x100] sm:$0xff]
        %v248 = vld [vmem:[#allocation4 + $0x120] sm:$0xff]
        %v249 = vld [vmem:[#allocation4 + $0x140] sm:$0xff]
        %v250 = vld [vmem:[#allocation4 + $0x160] sm:$0xff]
        %v251 = vld [vmem:[#allocation4 + $0x180] sm:$0xff]
        %v252 = vld [vmem:[#allocation4 + $0x1a0] sm:$0xff]
        %v253 = vld [vmem:[#allocation4 + $0x1c0] sm:$0xff]
        %v254 = vld [vmem:[#allocation4 + $0x1e0] sm:$0xff]
        %v255 = vld [vmem:[#allocation4 + $0x200] sm:$0xff]
        %v256 = vld [vmem:[#allocation4 + $0x220] sm:$0xff]
        %v257 = vpack.c.bf16 %v242, %v241
        %v258 = vpack.c.bf16 %v244, %v243
        %v259 = vpack.c.bf16 %v246, %v245
        %v260 = vpack.c.bf16 %v248, %v247
        %v261 = vpack.c.bf16 %v250, %v249
        %v262 = vpack.c.bf16 %v252, %v251
        %v263 = vpack.c.bf16 %v254, %v253
        %v264 = vpack.c.bf16 %v256, %v255
        %v265 = vld [vmem:[#allocation4 + $0x240] sm:$0xff]
        %v266 = vld [vmem:[#allocation4 + $0x260] sm:$0xff]
        %v267 = vld [vmem:[#allocation4 + $0x280] sm:$0xff]
        %v268 = vld [vmem:[#allocation4 + $0x2a0] sm:$0xff]
        %v269 = vpack.c.bf16 %v266, %v265
        %v270 = vpack.c.bf16 %v268, %v267
        %v271 = vld [vmem:[#allocation4 + $0x2c0] sm:$0xff]
        %v272 = vpack.c.bf16 %v271, %v271
        %v273 = vld [vmem:[%s227] sm:$0xff]
        %v274 = vld [vmem:[%s227 + $0x8] sm:$0xff]
        %v275 = vld [vmem:[%s227 + $0x10] sm:$0xff]
        %v276 = vld [vmem:[%s227 + $0x18] sm:$0xff]
        %v277 = vpack.c.bf16 %v274, %v273
        %v278 = vpack.c.bf16 %v276, %v275
        %v279 = vld [vmem:[%s1] sm:$0xff]
        %v280 = vld [vmem:[%s1 + $0x8] sm:$0xff]
        %v281 = vld [vmem:[%s1 + $0x10] sm:$0xff]
        %v282 = vld [vmem:[%s1 + $0x18] sm:$0xff]
        %v283 = vld [vmem:[%s1 + $0x20] sm:$0xff]
        %v284 = vld [vmem:[%s1 + $0x28] sm:$0xff]
        %v285 = vperm.slane %v236, 0
        %v286 = vperm.slane %v237, 0
        %v287 = vperm.slane %v238, 0
        %v288 = vperm.slane %v239, 0
        %v295 = vunpack.c.l.b16 %v279
        %v296 = vunpack.c.h.b16 %v279
        %v297 = vunpack.c.l.b16 %v280
        %v298 = vunpack.c.h.b16 %v280
        %v299 = vunpack.c.l.b16 %v281
        %v300 = vunpack.c.h.b16 %v281
        %v301 = vunpack.c.l.b16 %v282
        %v302 = vunpack.c.h.b16 %v282
        %v303 = vunpack.c.l.b16 %v283
        %v304 = vunpack.c.h.b16 %v283
        %v305 = vunpack.c.l.b16 %v284
        %v306 = vunpack.c.h.b16 %v284
        %v307 = vpack.c.b16 %v299, %v295
        %v308 = vpack.c.b16 %v300, %v296
        %v309 = vpack.c.b16 %v301, %v297
        %v310 = vpack.c.b16 %v302, %v298
        %v311 = vpack.c.b16 %v303, %v303
        %v312 = vpack.c.b16 %v304, %v304
        %v313 = vpack.c.b16 %v305, %v305
        %v314 = vpack.c.b16 %v306, %v306
        %vm319 = vcmask 187392
        %v321 = vsel %vm319, %v277, 0
        %v324 = vsel %vm319, %v278, 0
        %vm326 = vcmask 1042432
        %vm327 = vcmask 1043456
        %v328 = vsel %vm326, 4294967295, 65535
        %v329 = vsel %vm327, %v328, 0
        %v331 = vand.u32 %v311, %v329
        %v334 = vand.u32 %v312, %v329
        %v337 = vand.u32 %v313, %v329
        %v340 = vand.u32 %v314, %v329
        %342 = vmatpush.bf16.msra.mxu0 0
        %343 = vmatpush.bf16.msra.mxu0 0
        %344 = vmatpush.bf16.msra.mxu0 0
        %345 = vmatpush.bf16.msra.mxu0 0
        %346 = vmatpush.bf16.msra.mxu0 0
        %347 = vmatpush.bf16.msra.mxu0 0
        %348 = vmatpush.bf16.msra.mxu0 %v331
        %349 = vmatpush.bf16.msra.mxu0 %v307
        %350 = vmatmul.bf16.gmra.mxu0 %v321
        %v351 = vpop.f32.mrf.mxu0
        %v352 = vadd.f32 %v285, %v351
        %v353 = vpop.f32.mrf.mxu0
        %v354 = vadd.f32 %v285, %v353
        %355 = vmatmul.bf16.gmra.mxu0 %v324
        %v356 = vpop.f32.mrf.mxu0
        %v357 = vadd.f32 %v285, %v356
        %v358 = vpop.f32.mrf.mxu0
        %v359 = vadd.f32 %v285, %v358
        %360 = vdwg.mxu0
        %361 = vmatpush.bf16.msra.mxu0 0
        %362 = vmatpush.bf16.msra.mxu0 0
        %363 = vmatpush.bf16.msra.mxu0 0
        %364 = vmatpush.bf16.msra.mxu0 0
        %365 = vmatpush.bf16.msra.mxu0 0
        %366 = vmatpush.bf16.msra.mxu0 0
        %367 = vmatpush.bf16.msra.mxu0 %v334
        %368 = vmatpush.bf16.msra.mxu0 %v308
        %369 = vmatmul.bf16.gmra.mxu0 %v321
        %v370 = vpop.f32.mrf.mxu0
        %v371 = vadd.f32 %v286, %v370
        %v372 = vpop.f32.mrf.mxu0
        %v373 = vadd.f32 %v286, %v372
        %374 = vmatmul.bf16.gmra.mxu0 %v324
        %v375 = vpop.f32.mrf.mxu0
        %v376 = vadd.f32 %v286, %v375
        %v377 = vpop.f32.mrf.mxu0
        %v378 = vadd.f32 %v286, %v377
        %379 = vdwg.mxu0
        %380 = vmatpush.bf16.msra.mxu0 0
        %381 = vmatpush.bf16.msra.mxu0 0
        %382 = vmatpush.bf16.msra.mxu0 0
        %383 = vmatpush.bf16.msra.mxu0 0
        %384 = vmatpush.bf16.msra.mxu0 0
        %385 = vmatpush.bf16.msra.mxu0 0
        %386 = vmatpush.bf16.msra.mxu0 %v337
        %387 = vmatpush.bf16.msra.mxu0 %v309
        %388 = vmatmul.bf16.gmra.mxu0 %v321
        %v389 = vpop.f32.mrf.mxu0
        %v390 = vadd.f32 %v287, %v389
        %v391 = vpop.f32.mrf.mxu0
        %v392 = vadd.f32 %v287, %v391
        %393 = vmatmul.bf16.gmra.mxu0 %v324
        %v394 = vpop.f32.mrf.mxu0
        %v395 = vadd.f32 %v287, %v394
        %v396 = vpop.f32.mrf.mxu0
        %v397 = vadd.f32 %v287, %v396
        %398 = vdwg.mxu0
        %399 = vmatpush.bf16.msra.mxu0 0
        %400 = vmatpush.bf16.msra.mxu0 0
        %401 = vmatpush.bf16.msra.mxu0 0
        %402 = vmatpush.bf16.msra.mxu0 0
        %403 = vmatpush.bf16.msra.mxu0 0
        %404 = vmatpush.bf16.msra.mxu0 0
        %405 = vmatpush.bf16.msra.mxu0 %v340
        %406 = vmatpush.bf16.msra.mxu0 %v310
        %407 = vmatmul.bf16.gmra.mxu0 %v321
        %v408 = vpop.f32.mrf.mxu0
        %v409 = vadd.f32 %v288, %v408
        %v410 = vpop.f32.mrf.mxu0
        %v411 = vadd.f32 %v288, %v410
        %412 = vmatmul.bf16.gmra.mxu0 %v324
        %v413 = vpop.f32.mrf.mxu0
        %v414 = vadd.f32 %v288, %v413
        %v415 = vpop.f32.mrf.mxu0
        %v416 = vadd.f32 %v288, %v415
        %417 = vdwg.mxu0
        %v418 = vmax.f32 %v352, 0.0
        %v419 = vmax.f32 %v371, 0.0
        %v420 = vmax.f32 %v390, 0.0
        %v421 = vmax.f32 %v409, 0.0
        %v422 = vmax.f32 %v354, 0.0
        %v423 = vmax.f32 %v373, 0.0
        %v424 = vmax.f32 %v392, 0.0
        %v425 = vmax.f32 %v411, 0.0
        %v426 = vmax.f32 %v357, 0.0
        %v427 = vmax.f32 %v376, 0.0
        %v428 = vmax.f32 %v395, 0.0
        %v429 = vmax.f32 %v414, 0.0
        %v430 = vmax.f32 %v359, 0.0
        %v431 = vmax.f32 %v378, 0.0
        %v432 = vmax.f32 %v397, 0.0
        %v433 = vmax.f32 %v416, 0.0
        %v434 = vadd.f32 %v418, %v419
        %v435 = vadd.f32 %v434, %v420
        %v436 = vadd.f32 %v435, %v421
        %437 = vadd.xlane.f32.xlu0 %v436
        %v438 = vpop.xlane.xlu0 %437
        %v439 = vadd.f32 %v422, %v423
        %v440 = vadd.f32 %v439, %v424
        %v441 = vadd.f32 %v440, %v425
        %442 = vadd.xlane.f32.xlu0 %v441
        %v443 = vpop.xlane.xlu0 %442
        %v444 = vadd.f32 %v426, %v427
        %v445 = vadd.f32 %v444, %v428
        %v446 = vadd.f32 %v445, %v429
        %447 = vadd.xlane.f32.xlu0 %v446
        %v448 = vpop.xlane.xlu0 %447
        %v449 = vadd.f32 %v430, %v431
        %v450 = vadd.f32 %v449, %v432
        %v451 = vadd.f32 %v450, %v433
        %452 = vadd.xlane.f32.xlu0 %v451
        %v453 = vpop.xlane.xlu0 %452
        %v454 = vmul.f32 %v418, %v418
        %v455 = vmul.f32 %v419, %v419
        %v456 = vmul.f32 %v420, %v420
        %v457 = vmul.f32 %v421, %v421
        %v458 = vmul.f32 %v422, %v422
        %v459 = vmul.f32 %v423, %v423
        %v460 = vmul.f32 %v424, %v424
        %v461 = vmul.f32 %v425, %v425
        %v462 = vmul.f32 %v426, %v426
        %v463 = vmul.f32 %v427, %v427
        %v464 = vmul.f32 %v428, %v428
        %v465 = vmul.f32 %v429, %v429
        %v466 = vmul.f32 %v430, %v430
        %v467 = vmul.f32 %v431, %v431
        %v468 = vmul.f32 %v432, %v432
        %v469 = vmul.f32 %v433, %v433
        %v470 = vadd.f32 %v454, %v455
        %v471 = vadd.f32 %v470, %v456
        %v472 = vadd.f32 %v471, %v457
        %473 = vadd.xlane.f32.xlu0 %v472
        %v474 = vpop.xlane.xlu0 %473
        %v475 = vadd.f32 %v458, %v459
        %v476 = vadd.f32 %v475, %v460
        %v477 = vadd.f32 %v476, %v461
        %478 = vadd.xlane.f32.xlu0 %v477
        %v479 = vpop.xlane.xlu0 %478
        %v480 = vadd.f32 %v462, %v463
        %v481 = vadd.f32 %v480, %v464
        %v482 = vadd.f32 %v481, %v465
        %483 = vadd.xlane.f32.xlu0 %v482
        %v484 = vpop.xlane.xlu0 %483
        %v485 = vadd.f32 %v466, %v467
        %v486 = vadd.f32 %v485, %v468
        %v487 = vadd.f32 %v486, %v469
        %488 = vadd.xlane.f32.xlu0 %v487
        %v489 = vpop.xlane.xlu0 %488
        %v490 = vmul.f32 %v438, 0.001953125
        %v491 = vmul.f32 %v443, 0.001953125
        %v492 = vmul.f32 %v448, 0.001953125
        %v493 = vmul.f32 %v453, 0.001953125
        %v494 = vmul.f32 %v474, 0.001953125
        %v495 = vmul.f32 %v479, 0.001953125
        %v496 = vmul.f32 %v484, 0.001953125
        %v497 = vmul.f32 %v489, 0.001953125
        %v498 = vmul.f32 %v490, %v490
        %v499 = vmul.f32 %v491, %v491
        %v500 = vmul.f32 %v492, %v492
        %v501 = vmul.f32 %v493, %v493
        %v502 = vsub.f32 %v494, %v498
        %v503 = vsub.f32 %v495, %v499
        %v504 = vsub.f32 %v496, %v500
        %v505 = vsub.f32 %v497, %v501
        %v506 = vmax.f32 %v502, 0.0
        %v507 = vmax.f32 %v503, 0.0
        %v508 = vmax.f32 %v504, 0.0
        %v509 = vmax.f32 %v505, 0.0
        %v510 = vsub.f32 %v418, %v490
        %v511 = vsub.f32 %v419, %v490
        %v512 = vsub.f32 %v420, %v490
        %v513 = vsub.f32 %v421, %v490
        %v514 = vsub.f32 %v422, %v491
        %v515 = vsub.f32 %v423, %v491
        %v516 = vsub.f32 %v424, %v491
        %v517 = vsub.f32 %v425, %v491
        %v518 = vsub.f32 %v426, %v492
        %v519 = vsub.f32 %v427, %v492
        %v520 = vsub.f32 %v428, %v492
        %v521 = vsub.f32 %v429, %v492
        %v522 = vsub.f32 %v430, %v493
        %v523 = vsub.f32 %v431, %v493
        %v524 = vsub.f32 %v432, %v493
        %v525 = vsub.f32 %v433, %v493
        %v526 = vadd.f32 %v506, 1e-05
        %v527 = vadd.f32 %v507, 1e-05
        %v528 = vadd.f32 %v508, 1e-05
        %v529 = vadd.f32 %v509, 1e-05
        %v530 = vrsqrt.pop %v526
        %v531 = vmul.f32 %v530, %v526
        %v532 = vmul.f32 %v531, %v530
        %v533 = vmul.f32 0.5, %v532
        %v534 = vsub.f32 1.5, %v533
        %v535 = vmul.f32 %v530, %v534
        %vm536 = vweird.f32 %v526
        %vm537 = vweird.f32 %v530
        %vm538 = vmor %vm536, %vm537
        %v539 = vsel %vm538, %v530, %v535
        %v540 = vrsqrt.pop %v527
        %v541 = vmul.f32 %v540, %v527
        %v542 = vmul.f32 %v541, %v540
        %v543 = vmul.f32 0.5, %v542
        %v544 = vsub.f32 1.5, %v543
        %v545 = vmul.f32 %v540, %v544
        %vm546 = vweird.f32 %v527
        %vm547 = vweird.f32 %v540
        %vm548 = vmor %vm546, %vm547
        %v549 = vsel %vm548, %v540, %v545
        %v550 = vrsqrt.pop %v528
        %v551 = vmul.f32 %v550, %v528
        %v552 = vmul.f32 %v551, %v550
        %v553 = vmul.f32 0.5, %v552
        %v554 = vsub.f32 1.5, %v553
        %v555 = vmul.f32 %v550, %v554
        %vm556 = vweird.f32 %v528
        %vm557 = vweird.f32 %v550
        %vm558 = vmor %vm556, %vm557
        %v559 = vsel %vm558, %v550, %v555
        %v560 = vrsqrt.pop %v529
        %v561 = vmul.f32 %v560, %v529
        %v562 = vmul.f32 %v561, %v560
        %v563 = vmul.f32 0.5, %v562
        %v564 = vsub.f32 1.5, %v563
        %v565 = vmul.f32 %v560, %v564
        %vm566 = vweird.f32 %v529
        %vm567 = vweird.f32 %v560
        %vm568 = vmor %vm566, %vm567
        %v569 = vsel %vm568, %v560, %v565
        %v570 = vmul.f32 %v510, %v539
        %v571 = vmul.f32 %v511, %v539
        %v572 = vmul.f32 %v512, %v539
        %v573 = vmul.f32 %v513, %v539
        %v574 = vmul.f32 %v514, %v549
        %v575 = vmul.f32 %v515, %v549
        %v576 = vmul.f32 %v516, %v549
        %v577 = vmul.f32 %v517, %v549
        %v578 = vmul.f32 %v518, %v559
        %v579 = vmul.f32 %v519, %v559
        %v580 = vmul.f32 %v520, %v559
        %v581 = vmul.f32 %v521, %v559
        %v582 = vmul.f32 %v522, %v569
        %v583 = vmul.f32 %v523, %v569
        %v584 = vmul.f32 %v524, %v569
        %v585 = vmul.f32 %v525, %v569
        %v586 = vperm.slane %v236, 1
        %v587 = vperm.slane %v237, 1
        %v588 = vperm.slane %v238, 1
        %v589 = vperm.slane %v239, 1
        %v590 = vmul.f32 %v570, %v586
        %v591 = vmul.f32 %v571, %v587
        %v592 = vmul.f32 %v572, %v588
        %v593 = vmul.f32 %v573, %v589
        %v594 = vmul.f32 %v574, %v586
        %v595 = vmul.f32 %v575, %v587
        %v596 = vmul.f32 %v576, %v588
        %v597 = vmul.f32 %v577, %v589
        %v598 = vmul.f32 %v578, %v586
        %v599 = vmul.f32 %v579, %v587
        %v600 = vmul.f32 %v580, %v588
        %v601 = vmul.f32 %v581, %v589
        %v602 = vmul.f32 %v582, %v586
        %v603 = vmul.f32 %v583, %v587
        %v604 = vmul.f32 %v584, %v588
        %v605 = vmul.f32 %v585, %v589
        %v606 = vperm.slane %v236, 2
        %v607 = vperm.slane %v237, 2
        %v608 = vperm.slane %v238, 2
        %v609 = vperm.slane %v239, 2
        %v610 = vadd.f32 %v590, %v606
        %v611 = vadd.f32 %v591, %v607
        %v612 = vadd.f32 %v592, %v608
        %v613 = vadd.f32 %v593, %v609
        %v614 = vadd.f32 %v594, %v606
        %v615 = vadd.f32 %v595, %v607
        %v616 = vadd.f32 %v596, %v608
        %v617 = vadd.f32 %v597, %v609
        %v618 = vadd.f32 %v598, %v606
        %v619 = vadd.f32 %v599, %v607
        %v620 = vadd.f32 %v600, %v608
        %v621 = vadd.f32 %v601, %v609
        %v622 = vadd.f32 %v602, %v606
        %v623 = vadd.f32 %v603, %v607
        %v624 = vadd.f32 %v604, %v608
        %v625 = vadd.f32 %v605, %v609
        %v626 = vpack.c.bf16 %v614, %v610
        %v627 = vpack.c.bf16 %v615, %v611
        %v628 = vpack.c.bf16 %v616, %v612
        %v629 = vpack.c.bf16 %v617, %v613
        %v630 = vpack.c.bf16 %v622, %v618
        %v631 = vpack.c.bf16 %v623, %v619
        %v632 = vpack.c.bf16 %v624, %v620
        %v633 = vpack.c.bf16 %v625, %v621
        %v634 = vld [vmem:[#allocation2] sm:$0xf]
        %v635 = vld [vmem:[#allocation2 + $0x4] sm:$0xf]
        %v636 = vld [vmem:[#allocation2 + $0x8] sm:$0xf]
        %v637 = vld [vmem:[#allocation2 + $0xc] sm:$0xf]
        %v638 = vld [vmem:[#allocation2 + $0x10] sm:$0xf]
        %v639 = vld [vmem:[#allocation2 + $0x14] sm:$0xf]
        %v640 = vld [vmem:[#allocation2 + $0x18] sm:$0xf]
        %v641 = vld [vmem:[#allocation2 + $0x1c] sm:$0xf]
        %v642 = vld [vmem:[#allocation2 + $0x20] sm:$0xf]
        %v643 = vld [vmem:[#allocation2 + $0x24] sm:$0xf]
        %v644 = vld [vmem:[#allocation2 + $0x28] sm:$0xf]
        %v645 = vld [vmem:[#allocation2 + $0x2c] sm:$0xf]
        %v646 = vld [vmem:[#allocation2 + $0x30] sm:$0xf]
        %v647 = vld [vmem:[#allocation2 + $0x34] sm:$0xf]
        %v648 = vld [vmem:[#allocation2 + $0x38] sm:$0xf]
        %v649 = vld [vmem:[#allocation2 + $0x3c] sm:$0xf]
        %v650 = vld [vmem:[#allocation2 + $0x40] sm:$0xf]
        %v651 = vld [vmem:[#allocation2 + $0x44] sm:$0xf]
        %v652 = vld [vmem:[#allocation2 + $0x48] sm:$0xf]
        %v653 = vld [vmem:[#allocation2 + $0x4c] sm:$0xf]
        %v654 = vld [vmem:[#allocation2 + $0x50] sm:$0xf]
        %v655 = vld [vmem:[#allocation2 + $0x54] sm:$0xf]
        %v656 = vld [vmem:[#allocation2 + $0x58] sm:$0xf]
        %v657 = vld [vmem:[#allocation2 + $0x5c] sm:$0xf]
        %v658 = vld [vmem:[#allocation2 + $0x60] sm:$0xf]
        %v659 = vld [vmem:[#allocation2 + $0x64] sm:$0xf]
        %v660 = vld [vmem:[#allocation2 + $0x68] sm:$0xf]
        %v661 = vld [vmem:[#allocation2 + $0x6c] sm:$0xf]
        %v662 = vld [vmem:[#allocation2 + $0x70] sm:$0xf]
        %v663 = vld [vmem:[#allocation2 + $0x74] sm:$0xf]
        %v664 = vld [vmem:[#allocation2 + $0x78] sm:$0xf]
        %v665 = vld [vmem:[#allocation2 + $0x7c] sm:$0xf]
        %v666 = vld [vmem:[#allocation2 + $0x80] sm:$0xf]
        %v667 = vld [vmem:[#allocation2 + $0x84] sm:$0xf]
        %v668 = vld [vmem:[#allocation2 + $0x88] sm:$0xf]
        %v669 = vld [vmem:[#allocation2 + $0x8c] sm:$0xf]
        %v670 = vld [vmem:[#allocation2 + $0x90] sm:$0xf]
        %v671 = vld [vmem:[#allocation2 + $0x94] sm:$0xf]
        %v672 = vld [vmem:[#allocation2 + $0x98] sm:$0xf]
        %v673 = vld [vmem:[#allocation2 + $0x9c] sm:$0xf]
        %v674 = vld [vmem:[#allocation2 + $0xa0] sm:$0xf]
        %v675 = vld [vmem:[#allocation2 + $0xa4] sm:$0xf]
        %v676 = vld [vmem:[#allocation2 + $0xa8] sm:$0xf]
        %v677 = vld [vmem:[#allocation2 + $0xac] sm:$0xf]
        %v678 = vld [vmem:[#allocation2 + $0xb0] sm:$0xf]
        %v679 = vld [vmem:[#allocation2 + $0xb4] sm:$0xf]
        %v680 = vld [vmem:[#allocation2 + $0xb8] sm:$0xf]
        %v681 = vld [vmem:[#allocation2 + $0xbc] sm:$0xf]
        %v682 = vld [vmem:[#allocation2 + $0xc0] sm:$0xf]
        %v683 = vld [vmem:[#allocation2 + $0xc4] sm:$0xf]
        %v684 = vld [vmem:[#allocation2 + $0xc8] sm:$0xf]
        %v685 = vld [vmem:[#allocation2 + $0xcc] sm:$0xf]
        %v686 = vld [vmem:[#allocation2 + $0xd0] sm:$0xf]
        %v687 = vld [vmem:[#allocation2 + $0xd4] sm:$0xf]
        %v688 = vld [vmem:[#allocation2 + $0xd8] sm:$0xf]
        %v689 = vld [vmem:[#allocation2 + $0xdc] sm:$0xf]
        %v690 = vld [vmem:[#allocation2 + $0xe0] sm:$0xf]
        %v691 = vld [vmem:[#allocation2 + $0xe4] sm:$0xf]
        %v692 = vld [vmem:[#allocation2 + $0xe8] sm:$0xf]
        %v693 = vld [vmem:[#allocation2 + $0xec] sm:$0xf]
        %v694 = vld [vmem:[#allocation2 + $0xf0] sm:$0xf]
        %v695 = vld [vmem:[#allocation2 + $0xf4] sm:$0xf]
        %v696 = vld [vmem:[#allocation2 + $0xf8] sm:$0xf]
        %v697 = vld [vmem:[#allocation2 + $0xfc] sm:$0xf]
        %v698 = vperm.slane %v236, 3
        %v763 = vunpack.c.l.b16 %v634
        %v764 = vunpack.c.l.b16 %v635
        %v765 = vunpack.c.l.b16 %v636
        %v766 = vunpack.c.l.b16 %v637
        %v767 = vunpack.c.l.b16 %v638
        %v768 = vunpack.c.l.b16 %v639
        %v769 = vunpack.c.l.b16 %v640
        %v770 = vunpack.c.l.b16 %v641
        %v771 = vunpack.c.l.b16 %v642
        %v772 = vunpack.c.l.b16 %v643
        %v773 = vunpack.c.l.b16 %v644
        %v774 = vunpack.c.l.b16 %v645
        %v775 = vunpack.c.l.b16 %v646
        %v776 = vunpack.c.l.b16 %v647
        %v777 = vunpack.c.l.b16 %v648
        %v778 = vunpack.c.l.b16 %v649
        %v779 = vunpack.c.l.b16 %v650
        %v780 = vunpack.c.l.b16 %v651
        %v781 = vunpack.c.l.b16 %v652
        %v782 = vunpack.c.l.b16 %v653
        %v783 = vunpack.c.l.b16 %v654
        %v784 = vunpack.c.l.b16 %v655
        %v785 = vunpack.c.l.b16 %v656
        %v786 = vunpack.c.l.b16 %v657
        %v787 = vunpack.c.l.b16 %v658
        %v788 = vunpack.c.l.b16 %v659
        %v789 = vunpack.c.l.b16 %v660
        %v790 = vunpack.c.l.b16 %v661
        %v791 = vunpack.c.l.b16 %v662
        %v792 = vunpack.c.l.b16 %v663
        %v793 = vunpack.c.l.b16 %v664
        %v794 = vunpack.c.l.b16 %v665
        %v795 = vunpack.c.l.b16 %v666
        %v796 = vunpack.c.l.b16 %v667
        %v797 = vunpack.c.l.b16 %v668
        %v798 = vunpack.c.l.b16 %v669
        %v799 = vunpack.c.l.b16 %v670
        %v800 = vunpack.c.l.b16 %v671
        %v801 = vunpack.c.l.b16 %v672
        %v802 = vunpack.c.l.b16 %v673
        %v803 = vunpack.c.l.b16 %v674
        %v804 = vunpack.c.l.b16 %v675
        %v805 = vunpack.c.l.b16 %v676
        %v806 = vunpack.c.l.b16 %v677
        %v807 = vunpack.c.l.b16 %v678
        %v808 = vunpack.c.l.b16 %v679
        %v809 = vunpack.c.l.b16 %v680
        %v810 = vunpack.c.l.b16 %v681
        %v811 = vunpack.c.l.b16 %v682
        %v812 = vunpack.c.l.b16 %v683
        %v813 = vunpack.c.l.b16 %v684
        %v814 = vunpack.c.l.b16 %v685
        %v815 = vunpack.c.l.b16 %v686
        %v816 = vunpack.c.l.b16 %v687
        %v817 = vunpack.c.l.b16 %v688
        %v818 = vunpack.c.l.b16 %v689
        %v819 = vunpack.c.l.b16 %v690
        %v820 = vunpack.c.l.b16 %v691
        %v821 = vunpack.c.l.b16 %v692
        %v822 = vunpack.c.l.b16 %v693
        %v823 = vunpack.c.l.b16 %v694
        %v824 = vunpack.c.l.b16 %v695
        %v825 = vunpack.c.l.b16 %v696
        %v826 = vunpack.c.l.b16 %v697
        %v827 = vpack.c.b16 %v764, %v763
        %v828 = vpack.c.b16 %v766, %v765
        %v829 = vpack.c.b16 %v768, %v767
        %v830 = vpack.c.b16 %v770, %v769
        %v831 = vpack.c.b16 %v772, %v771
        %v832 = vpack.c.b16 %v774, %v773
        %v833 = vpack.c.b16 %v776, %v775
        %v834 = vpack.c.b16 %v778, %v777
        %v835 = vpack.c.b16 %v780, %v779
        %v836 = vpack.c.b16 %v782, %v781
        %v837 = vpack.c.b16 %v784, %v783
        %v838 = vpack.c.b16 %v786, %v785
        %v839 = vpack.c.b16 %v788, %v787
        %v840 = vpack.c.b16 %v790, %v789
        %v841 = vpack.c.b16 %v792, %v791
        %v842 = vpack.c.b16 %v794, %v793
        %v843 = vpack.c.b16 %v796, %v795
        %v844 = vpack.c.b16 %v798, %v797
        %v845 = vpack.c.b16 %v800, %v799
        %v846 = vpack.c.b16 %v802, %v801
        %v847 = vpack.c.b16 %v804, %v803
        %v848 = vpack.c.b16 %v806, %v805
        %v849 = vpack.c.b16 %v808, %v807
        %v850 = vpack.c.b16 %v810, %v809
        %v851 = vpack.c.b16 %v812, %v811
        %v852 = vpack.c.b16 %v814, %v813
        %v853 = vpack.c.b16 %v816, %v815
        %v854 = vpack.c.b16 %v818, %v817
        %v855 = vpack.c.b16 %v820, %v819
        %v856 = vpack.c.b16 %v822, %v821
        %v857 = vpack.c.b16 %v824, %v823
        %v858 = vpack.c.b16 %v826, %v825
        %891 = vmatpush.bf16.msra.mxu0 %v834
        %892 = vmatpush.bf16.msra.mxu0 %v833
        %893 = vmatpush.bf16.msra.mxu0 %v832
        %894 = vmatpush.bf16.msra.mxu0 %v831
        %895 = vmatpush.bf16.msra.mxu0 %v830
        %896 = vmatpush.bf16.msra.mxu0 %v829
        %897 = vmatpush.bf16.msra.mxu0 %v828
        %898 = vmatpush.bf16.msra.mxu0 %v827
        %899 = vmatmul.bf16.gmra.mxu0 %v626
        %v900 = vpop.f32.mrf.mxu0
        %v901 = vadd.f32 %v698, %v900
        %v902 = vpop.f32.mrf.mxu0
        %v903 = vadd.f32 %v698, %v902
        %904 = vmatmul.bf16.gmra.mxu0 %v630
        %v905 = vpop.f32.mrf.mxu0
        %v906 = vadd.f32 %v698, %v905
        %v907 = vpop.f32.mrf.mxu0
        %v908 = vadd.f32 %v698, %v907
        %909 = vdwg.mxu0
        %910 = vmatpush.bf16.msra.mxu0 %v842
        %911 = vmatpush.bf16.msra.mxu0 %v841
        %912 = vmatpush.bf16.msra.mxu0 %v840
        %913 = vmatpush.bf16.msra.mxu0 %v839
        %914 = vmatpush.bf16.msra.mxu0 %v838
        %915 = vmatpush.bf16.msra.mxu0 %v837
        %916 = vmatpush.bf16.msra.mxu0 %v836
        %917 = vmatpush.bf16.msra.mxu0 %v835
        %918 = vmatmul.bf16.gmra.mxu0 %v627
        %v919 = vpop.f32.mrf.mxu0
        %v920 = vadd.f32 %v901, %v919
        %v921 = vpop.f32.mrf.mxu0
        %v922 = vadd.f32 %v903, %v921
        %923 = vmatmul.bf16.gmra.mxu0 %v631
        %v924 = vpop.f32.mrf.mxu0
        %v925 = vadd.f32 %v906, %v924
        %v926 = vpop.f32.mrf.mxu0
        %v927 = vadd.f32 %v908, %v926
        %928 = vdwg.mxu0
        %929 = vmatpush.bf16.msra.mxu0 %v850
        %930 = vmatpush.bf16.msra.mxu0 %v849
        %931 = vmatpush.bf16.msra.mxu0 %v848
        %932 = vmatpush.bf16.msra.mxu0 %v847
        %933 = vmatpush.bf16.msra.mxu0 %v846
        %934 = vmatpush.bf16.msra.mxu0 %v845
        %935 = vmatpush.bf16.msra.mxu0 %v844
        %936 = vmatpush.bf16.msra.mxu0 %v843
        %937 = vmatmul.bf16.gmra.mxu0 %v628
        %v938 = vpop.f32.mrf.mxu0
        %v939 = vadd.f32 %v920, %v938
        %v940 = vpop.f32.mrf.mxu0
        %v941 = vadd.f32 %v922, %v940
        %942 = vmatmul.bf16.gmra.mxu0 %v632
        %v943 = vpop.f32.mrf.mxu0
        %v944 = vadd.f32 %v925, %v943
        %v945 = vpop.f32.mrf.mxu0
        %v946 = vadd.f32 %v927, %v945
        %947 = vdwg.mxu0
        %948 = vmatpush.bf16.msra.mxu0 %v858
        %949 = vmatpush.bf16.msra.mxu0 %v857
        %950 = vmatpush.bf16.msra.mxu0 %v856
        %951 = vmatpush.bf16.msra.mxu0 %v855
        %952 = vmatpush.bf16.msra.mxu0 %v854
        %953 = vmatpush.bf16.msra.mxu0 %v853
        %954 = vmatpush.bf16.msra.mxu0 %v852
        %955 = vmatpush.bf16.msra.mxu0 %v851
        %956 = vmatmul.bf16.gmra.mxu0 %v629
        %v957 = vpop.f32.mrf.mxu0
        %v958 = vadd.f32 %v939, %v957
        %v959 = vpop.f32.mrf.mxu0
        %v960 = vadd.f32 %v941, %v959
        %961 = vmatmul.bf16.gmra.mxu0 %v633
        %v962 = vpop.f32.mrf.mxu0
        %v963 = vadd.f32 %v944, %v962
        %v964 = vpop.f32.mrf.mxu0
        %v965 = vadd.f32 %v946, %v964
        %966 = vdwg.mxu0
        %v967 = vmax.f32 %v958, 0.0
        %v968 = vmax.f32 %v960, 0.0
        %v969 = vmax.f32 %v963, 0.0
        %v970 = vmax.f32 %v965, 0.0
        %971 = vadd.xlane.f32.xlu0 %v967
        %v972 = vpop.xlane.xlu0 %971
        %973 = vadd.xlane.f32.xlu0 %v968
        %v974 = vpop.xlane.xlu0 %973
        %975 = vadd.xlane.f32.xlu0 %v969
        %v976 = vpop.xlane.xlu0 %975
        %977 = vadd.xlane.f32.xlu0 %v970
        %v978 = vpop.xlane.xlu0 %977
        %v979 = vmul.f32 %v967, %v967
        %v980 = vmul.f32 %v968, %v968
        %v981 = vmul.f32 %v969, %v969
        %v982 = vmul.f32 %v970, %v970
        %983 = vadd.xlane.f32.xlu0 %v979
        %v984 = vpop.xlane.xlu0 %983
        %985 = vadd.xlane.f32.xlu0 %v980
        %v986 = vpop.xlane.xlu0 %985
        %987 = vadd.xlane.f32.xlu0 %v981
        %v988 = vpop.xlane.xlu0 %987
        %989 = vadd.xlane.f32.xlu0 %v982
        %v990 = vpop.xlane.xlu0 %989
        %v991 = vmul.f32 %v972, 0.0078125
        %v992 = vmul.f32 %v974, 0.0078125
        %v993 = vmul.f32 %v976, 0.0078125
        %v994 = vmul.f32 %v978, 0.0078125
        %v995 = vmul.f32 %v984, 0.0078125
        %v996 = vmul.f32 %v986, 0.0078125
        %v997 = vmul.f32 %v988, 0.0078125
        %v998 = vmul.f32 %v990, 0.0078125
        %v999 = vmul.f32 %v991, %v991
        %v1000 = vmul.f32 %v992, %v992
        %v1001 = vmul.f32 %v993, %v993
        %v1002 = vmul.f32 %v994, %v994
        %v1003 = vsub.f32 %v995, %v999
        %v1004 = vsub.f32 %v996, %v1000
        %v1005 = vsub.f32 %v997, %v1001
        %v1006 = vsub.f32 %v998, %v1002
        %v1007 = vmax.f32 %v1003, 0.0
        %v1008 = vmax.f32 %v1004, 0.0
        %v1009 = vmax.f32 %v1005, 0.0
        %v1010 = vmax.f32 %v1006, 0.0
        %v1011 = vsub.f32 %v967, %v991
        %v1012 = vsub.f32 %v968, %v992
        %v1013 = vsub.f32 %v969, %v993
        %v1014 = vsub.f32 %v970, %v994
        %v1015 = vadd.f32 %v1007, 1e-05
        %v1016 = vadd.f32 %v1008, 1e-05
        %v1017 = vadd.f32 %v1009, 1e-05
        %v1018 = vadd.f32 %v1010, 1e-05
        %v1019 = vrsqrt.pop %v1015
        %v1020 = vmul.f32 %v1019, %v1015
        %v1021 = vmul.f32 %v1020, %v1019
        %v1022 = vmul.f32 0.5, %v1021
        %v1023 = vsub.f32 1.5, %v1022
        %v1024 = vmul.f32 %v1019, %v1023
        %vm1025 = vweird.f32 %v1015
        %vm1026 = vweird.f32 %v1019
        %vm1027 = vmor %vm1025, %vm1026
        %v1028 = vsel %vm1027, %v1019, %v1024
        %v1029 = vrsqrt.pop %v1016
        %v1030 = vmul.f32 %v1029, %v1016
        %v1031 = vmul.f32 %v1030, %v1029
        %v1032 = vmul.f32 0.5, %v1031
        %v1033 = vsub.f32 1.5, %v1032
        %v1034 = vmul.f32 %v1029, %v1033
        %vm1035 = vweird.f32 %v1016
        %vm1036 = vweird.f32 %v1029
        %vm1037 = vmor %vm1035, %vm1036
        %v1038 = vsel %vm1037, %v1029, %v1034
        %v1039 = vrsqrt.pop %v1017
        %v1040 = vmul.f32 %v1039, %v1017
        %v1041 = vmul.f32 %v1040, %v1039
        %v1042 = vmul.f32 0.5, %v1041
        %v1043 = vsub.f32 1.5, %v1042
        %v1044 = vmul.f32 %v1039, %v1043
        %vm1045 = vweird.f32 %v1017
        %vm1046 = vweird.f32 %v1039
        %vm1047 = vmor %vm1045, %vm1046
        %v1048 = vsel %vm1047, %v1039, %v1044
        %v1049 = vrsqrt.pop %v1018
        %v1050 = vmul.f32 %v1049, %v1018
        %v1051 = vmul.f32 %v1050, %v1049
        %v1052 = vmul.f32 0.5, %v1051
        %v1053 = vsub.f32 1.5, %v1052
        %v1054 = vmul.f32 %v1049, %v1053
        %vm1055 = vweird.f32 %v1018
        %vm1056 = vweird.f32 %v1049
        %vm1057 = vmor %vm1055, %vm1056
        %v1058 = vsel %vm1057, %v1049, %v1054
        %v1059 = vmul.f32 %v1011, %v1028
        %v1060 = vmul.f32 %v1012, %v1038
        %v1061 = vmul.f32 %v1013, %v1048
        %v1062 = vmul.f32 %v1014, %v1058
        %v1063 = vperm.slane %v236, 4
        %v1064 = vmul.f32 %v1059, %v1063
        %v1065 = vmul.f32 %v1060, %v1063
        %v1066 = vmul.f32 %v1061, %v1063
        %v1067 = vmul.f32 %v1062, %v1063
        %v1068 = vperm.slane %v236, 5
        %v1069 = vadd.f32 %v1064, %v1068
        %v1070 = vadd.f32 %v1065, %v1068
        %v1071 = vadd.f32 %v1066, %v1068
        %v1072 = vadd.f32 %v1067, %v1068
        %v1073 = vpack.c.bf16 %v1070, %v1069
        %v1074 = vpack.c.bf16 %v1072, %v1071
        %v1075 = vperm.slane %v236, 6
        %1076 = vmatpush.bf16.msra.mxu0 %v264
        %1077 = vmatpush.bf16.msra.mxu0 %v263
        %1078 = vmatpush.bf16.msra.mxu0 %v262
        %1079 = vmatpush.bf16.msra.mxu0 %v261
        %1080 = vmatpush.bf16.msra.mxu0 %v260
        %1081 = vmatpush.bf16.msra.mxu0 %v259
        %1082 = vmatpush.bf16.msra.mxu0 %v258
        %1083 = vmatpush.bf16.msra.mxu0 %v257
        %1084 = vmatmul.bf16.gmra.mxu0 %v1073
        %v1085 = vpop.f32.mrf.mxu0
        %v1086 = vadd.f32 %v1075, %v1085
        %v1087 = vpop.f32.mrf.mxu0
        %v1088 = vadd.f32 %v1075, %v1087
        %1089 = vmatmul.bf16.gmra.mxu0 %v1074
        %v1090 = vpop.f32.mrf.mxu0
        %v1091 = vadd.f32 %v1075, %v1090
        %v1092 = vpop.f32.mrf.mxu0
        %v1093 = vadd.f32 %v1075, %v1092
        %1094 = vdwg.mxu0
        %v1095 = vmax.f32 %v1086, 0.0
        %v1096 = vmax.f32 %v1088, 0.0
        %v1097 = vmax.f32 %v1091, 0.0
        %v1098 = vmax.f32 %v1093, 0.0
        %vm1099 = vcmask 261120
        %v1100 = vsel %vm1099, %v1095, 0.0
        %1101 = vadd.xlane.f32.xlu0 %v1100
        %v1102 = vpop.xlane.xlu0 %1101
        %v1103 = vsel %vm1099, %v1096, 0.0
        %1104 = vadd.xlane.f32.xlu0 %v1103
        %v1105 = vpop.xlane.xlu0 %1104
        %v1106 = vsel %vm1099, %v1097, 0.0
        %1107 = vadd.xlane.f32.xlu0 %v1106
        %v1108 = vpop.xlane.xlu0 %1107
        %v1109 = vsel %vm1099, %v1098, 0.0
        %1110 = vadd.xlane.f32.xlu0 %v1109
        %v1111 = vpop.xlane.xlu0 %1110
        %v1112 = vmul.f32 %v1095, %v1095
        %v1113 = vmul.f32 %v1096, %v1096
        %v1114 = vmul.f32 %v1097, %v1097
        %v1115 = vmul.f32 %v1098, %v1098
        %v1116 = vsel %vm1099, %v1112, 0.0
        %1117 = vadd.xlane.f32.xlu0 %v1116
        %v1118 = vpop.xlane.xlu0 %1117
        %v1119 = vsel %vm1099, %v1113, 0.0
        %1120 = vadd.xlane.f32.xlu0 %v1119
        %v1121 = vpop.xlane.xlu0 %1120
        %v1122 = vsel %vm1099, %v1114, 0.0
        %1123 = vadd.xlane.f32.xlu0 %v1122
        %v1124 = vpop.xlane.xlu0 %1123
        %v1125 = vsel %vm1099, %v1115, 0.0
        %1126 = vadd.xlane.f32.xlu0 %v1125
        %v1127 = vpop.xlane.xlu0 %1126
        %v1128 = vmul.f32 %v1102, 0.03125
        %v1129 = vmul.f32 %v1105, 0.03125
        %v1130 = vmul.f32 %v1108, 0.03125
        %v1131 = vmul.f32 %v1111, 0.03125
        %v1132 = vmul.f32 %v1118, 0.03125
        %v1133 = vmul.f32 %v1121, 0.03125
        %v1134 = vmul.f32 %v1124, 0.03125
        %v1135 = vmul.f32 %v1127, 0.03125
        %v1136 = vmul.f32 %v1128, %v1128
        %v1137 = vmul.f32 %v1129, %v1129
        %v1138 = vmul.f32 %v1130, %v1130
        %v1139 = vmul.f32 %v1131, %v1131
        %v1140 = vsub.f32 %v1132, %v1136
        %v1141 = vsub.f32 %v1133, %v1137
        %v1142 = vsub.f32 %v1134, %v1138
        %v1143 = vsub.f32 %v1135, %v1139
        %v1144 = vmax.f32 %v1140, 0.0
        %v1145 = vmax.f32 %v1141, 0.0
        %v1146 = vmax.f32 %v1142, 0.0
        %v1147 = vmax.f32 %v1143, 0.0
        %v1148 = vsub.f32 %v1095, %v1128
        %v1149 = vsub.f32 %v1096, %v1129
        %v1150 = vsub.f32 %v1097, %v1130
        %v1151 = vsub.f32 %v1098, %v1131
        %v1152 = vadd.f32 %v1144, 1e-05
        %v1153 = vadd.f32 %v1145, 1e-05
        %v1154 = vadd.f32 %v1146, 1e-05
        %v1155 = vadd.f32 %v1147, 1e-05
        %v1156 = vrsqrt.pop %v1152
        %v1157 = vmul.f32 %v1156, %v1152
        %v1158 = vmul.f32 %v1157, %v1156
        %v1159 = vmul.f32 0.5, %v1158
        %v1160 = vsub.f32 1.5, %v1159
        %v1161 = vmul.f32 %v1156, %v1160
        %vm1162 = vweird.f32 %v1152
        %vm1163 = vweird.f32 %v1156
        %vm1164 = vmor %vm1162, %vm1163
        %v1165 = vsel %vm1164, %v1156, %v1161
        %v1166 = vrsqrt.pop %v1153
        %v1167 = vmul.f32 %v1166, %v1153
        %v1168 = vmul.f32 %v1167, %v1166
        %v1169 = vmul.f32 0.5, %v1168
        %v1170 = vsub.f32 1.5, %v1169
        %v1171 = vmul.f32 %v1166, %v1170
        %vm1172 = vweird.f32 %v1153
        %vm1173 = vweird.f32 %v1166
        %vm1174 = vmor %vm1172, %vm1173
        %v1175 = vsel %vm1174, %v1166, %v1171
        %v1176 = vrsqrt.pop %v1154
        %v1177 = vmul.f32 %v1176, %v1154
        %v1178 = vmul.f32 %v1177, %v1176
        %v1179 = vmul.f32 0.5, %v1178
        %v1180 = vsub.f32 1.5, %v1179
        %v1181 = vmul.f32 %v1176, %v1180
        %vm1182 = vweird.f32 %v1154
        %vm1183 = vweird.f32 %v1176
        %vm1184 = vmor %vm1182, %vm1183
        %v1185 = vsel %vm1184, %v1176, %v1181
        %v1186 = vrsqrt.pop %v1155
        %v1187 = vmul.f32 %v1186, %v1155
        %v1188 = vmul.f32 %v1187, %v1186
        %v1189 = vmul.f32 0.5, %v1188
        %v1190 = vsub.f32 1.5, %v1189
        %v1191 = vmul.f32 %v1186, %v1190
        %vm1192 = vweird.f32 %v1155
        %vm1193 = vweird.f32 %v1186
        %vm1194 = vmor %vm1192, %vm1193
        %v1195 = vsel %vm1194, %v1186, %v1191
        %v1196 = vmul.f32 %v1148, %v1165
        %v1197 = vmul.f32 %v1149, %v1175
        %v1198 = vmul.f32 %v1150, %v1185
        %v1199 = vmul.f32 %v1151, %v1195
        %v1200 = vperm.slane %v236, 7
        %v1201 = vmul.f32 %v1196, %v1200
        %v1202 = vmul.f32 %v1197, %v1200
        %v1203 = vmul.f32 %v1198, %v1200
        %v1204 = vmul.f32 %v1199, %v1200
        %v1205 = vperm.slane %v240, 0
        %v1206 = vadd.f32 %v1201, %v1205
        %v1207 = vadd.f32 %v1202, %v1205
        %v1208 = vadd.f32 %v1203, %v1205
        %v1209 = vadd.f32 %v1204, %v1205
        %v1210 = vpack.c.bf16 %v1207, %v1206
        %v1211 = vpack.c.bf16 %v1209, %v1208
        %v1212 = vperm.slane %v240, 1
        %v1214 = vsel %vm1099, %v1210, 0
        %v1217 = vsel %vm1099, %v1211, 0
        %1219 = vmatpush.bf16.msra.mxu0 0
        %1220 = vmatpush.bf16.msra.mxu0 0
        %1221 = vmatpush.bf16.msra.mxu0 0
        %1222 = vmatpush.bf16.msra.mxu0 0
        %1223 = vmatpush.bf16.msra.mxu0 0
        %1224 = vmatpush.bf16.msra.mxu0 0
        %1225 = vmatpush.bf16.msra.mxu0 %v270
        %1226 = vmatpush.bf16.msra.mxu0 %v269
        %1227 = vmatmul.bf16.gmra.mxu0 %v1214
        %v1228 = vpop.f32.mrf.mxu0
        %v1229 = vadd.f32 %v1212, %v1228
        %v1230 = vpop.f32.mrf.mxu0
        %v1231 = vadd.f32 %v1212, %v1230
        %1232 = vmatmul.bf16.gmra.mxu0 %v1217
        %v1233 = vpop.f32.mrf.mxu0
        %v1234 = vadd.f32 %v1212, %v1233
        %v1235 = vpop.f32.mrf.mxu0
        %v1236 = vadd.f32 %v1212, %v1235
        %1237 = vdwg.mxu0
        %v1238 = vmax.f32 %v1229, 0.0
        %v1239 = vmax.f32 %v1231, 0.0
        %v1240 = vmax.f32 %v1234, 0.0
        %v1241 = vmax.f32 %v1236, 0.0
        %vm1242 = vcmask 64512
        %v1243 = vsel %vm1242, %v1238, 0.0
        %1244 = vadd.xlane.f32.xlu0 %v1243
        %v1245 = vpop.xlane.xlu0 %1244
        %v1246 = vsel %vm1242, %v1239, 0.0
        %1247 = vadd.xlane.f32.xlu0 %v1246
        %v1248 = vpop.xlane.xlu0 %1247
        %v1249 = vsel %vm1242, %v1240, 0.0
        %1250 = vadd.xlane.f32.xlu0 %v1249
        %v1251 = vpop.xlane.xlu0 %1250
        %v1252 = vsel %vm1242, %v1241, 0.0
        %1253 = vadd.xlane.f32.xlu0 %v1252
        %v1254 = vpop.xlane.xlu0 %1253
        %v1255 = vmul.f32 %v1238, %v1238
        %v1256 = vmul.f32 %v1239, %v1239
        %v1257 = vmul.f32 %v1240, %v1240
        %v1258 = vmul.f32 %v1241, %v1241
        %v1259 = vsel %vm1242, %v1255, 0.0
        %1260 = vadd.xlane.f32.xlu0 %v1259
        %v1261 = vpop.xlane.xlu0 %1260
        %v1262 = vsel %vm1242, %v1256, 0.0
        %1263 = vadd.xlane.f32.xlu0 %v1262
        %v1264 = vpop.xlane.xlu0 %1263
        %v1265 = vsel %vm1242, %v1257, 0.0
        %1266 = vadd.xlane.f32.xlu0 %v1265
        %v1267 = vpop.xlane.xlu0 %1266
        %v1268 = vsel %vm1242, %v1258, 0.0
        %1269 = vadd.xlane.f32.xlu0 %v1268
        %v1270 = vpop.xlane.xlu0 %1269
        %v1271 = vmul.f32 %v1245, 0.125
        %v1272 = vmul.f32 %v1248, 0.125
        %v1273 = vmul.f32 %v1251, 0.125
        %v1274 = vmul.f32 %v1254, 0.125
        %v1275 = vmul.f32 %v1261, 0.125
        %v1276 = vmul.f32 %v1264, 0.125
        %v1277 = vmul.f32 %v1267, 0.125
        %v1278 = vmul.f32 %v1270, 0.125
        %v1279 = vmul.f32 %v1271, %v1271
        %v1280 = vmul.f32 %v1272, %v1272
        %v1281 = vmul.f32 %v1273, %v1273
        %v1282 = vmul.f32 %v1274, %v1274
        %v1283 = vsub.f32 %v1275, %v1279
        %v1284 = vsub.f32 %v1276, %v1280
        %v1285 = vsub.f32 %v1277, %v1281
        %v1286 = vsub.f32 %v1278, %v1282
        %v1287 = vmax.f32 %v1283, 0.0
        %v1288 = vmax.f32 %v1284, 0.0
        %v1289 = vmax.f32 %v1285, 0.0
        %v1290 = vmax.f32 %v1286, 0.0
        %v1291 = vsub.f32 %v1238, %v1271
        %v1292 = vsub.f32 %v1239, %v1272
        %v1293 = vsub.f32 %v1240, %v1273
        %v1294 = vsub.f32 %v1241, %v1274
        %v1295 = vadd.f32 %v1287, 1e-05
        %v1296 = vadd.f32 %v1288, 1e-05
        %v1297 = vadd.f32 %v1289, 1e-05
        %v1298 = vadd.f32 %v1290, 1e-05
        %v1299 = vrsqrt.pop %v1295
        %v1300 = vmul.f32 %v1299, %v1295
        %v1301 = vmul.f32 %v1300, %v1299
        %v1302 = vmul.f32 0.5, %v1301
        %v1303 = vsub.f32 1.5, %v1302
        %v1304 = vmul.f32 %v1299, %v1303
        %vm1305 = vweird.f32 %v1295
        %vm1306 = vweird.f32 %v1299
        %vm1307 = vmor %vm1305, %vm1306
        %v1308 = vsel %vm1307, %v1299, %v1304
        %v1309 = vrsqrt.pop %v1296
        %v1310 = vmul.f32 %v1309, %v1296
        %v1311 = vmul.f32 %v1310, %v1309
        %v1312 = vmul.f32 0.5, %v1311
        %v1313 = vsub.f32 1.5, %v1312
        %v1314 = vmul.f32 %v1309, %v1313
        %vm1315 = vweird.f32 %v1296
        %vm1316 = vweird.f32 %v1309
        %vm1317 = vmor %vm1315, %vm1316
        %v1318 = vsel %vm1317, %v1309, %v1314
        %v1319 = vrsqrt.pop %v1297
        %v1320 = vmul.f32 %v1319, %v1297
        %v1321 = vmul.f32 %v1320, %v1319
        %v1322 = vmul.f32 0.5, %v1321
        %v1323 = vsub.f32 1.5, %v1322
        %v1324 = vmul.f32 %v1319, %v1323
        %vm1325 = vweird.f32 %v1297
        %vm1326 = vweird.f32 %v1319
        %vm1327 = vmor %vm1325, %vm1326
        %v1328 = vsel %vm1327, %v1319, %v1324
        %v1329 = vrsqrt.pop %v1298
        %v1330 = vmul.f32 %v1329, %v1298
        %v1331 = vmul.f32 %v1330, %v1329
        %v1332 = vmul.f32 0.5, %v1331
        %v1333 = vsub.f32 1.5, %v1332
        %v1334 = vmul.f32 %v1329, %v1333
        %vm1335 = vweird.f32 %v1298
        %vm1336 = vweird.f32 %v1329
        %vm1337 = vmor %vm1335, %vm1336
        %v1338 = vsel %vm1337, %v1329, %v1334
        %v1339 = vmul.f32 %v1291, %v1308
        %v1340 = vmul.f32 %v1292, %v1318
        %v1341 = vmul.f32 %v1293, %v1328
        %v1342 = vmul.f32 %v1294, %v1338
        %v1343 = vperm.slane %v240, 2
        %v1344 = vmul.f32 %v1339, %v1343
        %v1345 = vmul.f32 %v1340, %v1343
        %v1346 = vmul.f32 %v1341, %v1343
        %v1347 = vmul.f32 %v1342, %v1343
        %v1348 = vperm.slane %v240, 3
        %v1349 = vadd.f32 %v1344, %v1348
        %v1350 = vadd.f32 %v1345, %v1348
        %v1351 = vadd.f32 %v1346, %v1348
        %v1352 = vadd.f32 %v1347, %v1348
        %v1353 = vpack.c.bf16 %v1350, %v1349
        %v1354 = vpack.c.bf16 %v1352, %v1351
        %v1355 = vperm.slane %v240, 4
        %v1357 = vsel %vm1242, %v1353, 0
        %v1360 = vsel %vm1242, %v1354, 0
        %v1363 = vsel %vm327, %v272, 0
        %1365 = vmatpush.bf16.msra.mxu0 0
        %1366 = vmatpush.bf16.msra.mxu0 0
        %1367 = vmatpush.bf16.msra.mxu0 0
        %1368 = vmatpush.bf16.msra.mxu0 0
        %1369 = vmatpush.bf16.msra.mxu0 0
        %1370 = vmatpush.bf16.msra.mxu0 0
        %1371 = vmatpush.bf16.msra.mxu0 0
        %1372 = vmatpush.bf16.msra.mxu0 %v1363
        %1373 = vmatmul.bf16.gmra.mxu0 %v1357
        %v1374 = vpop.f32.mrf.mxu0
        %v1375 = vadd.f32 %v1355, %v1374
        %v1376 = vpop.f32.mrf.mxu0
        %v1377 = vadd.f32 %v1355, %v1376
        %1378 = vmatmul.bf16.gmra.mxu0 %v1360
        %v1379 = vpop.f32.mrf.mxu0
        %v1380 = vadd.f32 %v1355, %v1379
        %v1381 = vpop.f32.mrf.mxu0
        %v1382 = vadd.f32 %v1355, %v1381
        %1383 = vdwg.mxu0
        %vm1384 = vcmask 15360
        %1385 = vst.msk [vmem:[%s233] sm:$0xff] %vm1384, %v1375
        %1386 = vst.msk [vmem:[%s233 + $0x8] sm:$0xff] %vm1384, %v1377
        %1387 = vst.msk [vmem:[%s233 + $0x10] sm:$0xff] %vm1384, %v1380
        %1388 = vst.msk [vmem:[%s233 + $0x18] sm:$0xff] %vm1384, %v1382
        %s1389 = smul.u32 4, %s17
        %p1390 = scmp.lt.s32.totalorder %s1389, 7
        %s1391 = scalar_select %p1390, %s1389, 7
        %s1392 = smul.addr %s1391, 8
        %s1393 = scalar_lea.vmem %s4, %s1392
        // Predicated region
        $region45: #{tpu_custom_call.1} parent=35 // pred_check
          %p1394 = pneg %p124
        $region46: #{tpu_custom_call.1} parent=35 // pred_check_branch
          %1396 = sbr.rel (%p1394) target = $region48
        $region47: #{tpu_custom_call.1} parent=35 // pred_region
          %s1397 = smul.u32 4, %s17
        $region48: #{tpu_custom_call.1} parent=35 // pred_fallthru
          _
      $region36: #{tpu_custom_call.1} parent=5 // pred_fallthru
        _
      %p1398 = scmp.le.s32.totalorder 2, %s12
      // Predicated region
      $region49: #{tpu_custom_call.1} parent=5 // pred_check
        %p1399 = pneg %p1398
      $region50: #{tpu_custom_call.1} parent=5 // pred_check_branch
        %1401 = sbr.rel (%p1399) target = $region52
      $region51: #{tpu_custom_call.1} parent=5 // pred_region
        %s1402 = ssub.s32 %s12, 2
        // Predicated region
        $region53: #{tpu_custom_call.1} parent=51 // pred_check
          %p1403 = pneg %p130
        $region54: #{tpu_custom_call.1} parent=51 // pred_check_branch
          %1405 = sbr.rel (%p1403) target = $region56
        $region55: #{tpu_custom_call.1} parent=51 // pred_region
          %s1406 = smul.u32 4, %s18
          %p1407 = scmp.lt.s32.totalorder %s1406, 7
          %s1408 = scalar_select %p1407, %s1406, 7
          %s1409 = smul.addr %s1408, 8
          %s1410 = scalar_lea.vmem %s4, %s1409
        $region56: #{tpu_custom_call.1} parent=51 // pred_fallthru
          _
      $region52: #{tpu_custom_call.1} parent=5 // pred_fallthru
        _
    $region6: #{tpu_custom_call.1} parent=1 // loop_footer
      %s16 = sadd.s32 1, %s12
    $region7: #{tpu_custom_call.1} parent=1 // loop_footer_branch
      %11 = sbr.rel target = $region3
    $region8: #{tpu_custom_call.1} parent=1 // loop_exit
      _
    %1411 = vsyncpa [#allocation3], 1
    %s1412 = scalar_lea.sflag [#allocation3], 1
    %1413 = vsyncpa %s1412, 1
    %1414 = vsyncpa [#allocation5], 1

</llo_original>
